<compile_context>
chip_gen: v5e
topology: v5e:2x2
jax: 0.10.0
libtpu: 0.0.40
codegen_flags: <defaults>
</compile_context>

<pallas_src>
import jax
import jax.numpy as jnp
import numpy as np
from jax.experimental import pallas as pl
from jax.experimental.pallas import tpu as pltpu

D_MODEL = 768
N_OUT = 4


def aspect_attention_kernel(x_ref, w_in_ref, w_i_ref, w_out_ref, b_out_ref,
                            out_ref, attn_ref):
    tb, s, d = x_ref.shape
    x = x_ref[...]                                                   # (TB, S, D) f32

    # ---- big matmul on the MXU: flatten (batch, seq) into the M dimension ----
    x2 = x.reshape(tb * s, d).astype(jnp.bfloat16)                   # (TB*S, D) bf16
    h = jnp.tanh(jnp.dot(x2, w_in_ref[...],
                         preferred_element_type=jnp.float32))        # (TB*S, D) f32

    # ---- rank-1 projection on VPU + lane reduce (avoid N=1 MXU matmul) ----
    h3 = h.reshape(tb, s, d)                                         # (TB, S, D)
    scores = jnp.sum(h3 * w_i_ref[...], axis=-1)                     # (TB, S) f32

    # ---- softmax over the sequence axis (per batch row), f32 ----
    m = jnp.max(scores, axis=-1, keepdims=True)                      # (TB, 1)
    e = jnp.exp(scores - m)                                          # (TB, S)
    denom = jnp.sum(e, axis=-1, keepdims=True)                       # (TB, 1)
    attn = e * pl.reciprocal(denom, approx=True)                     # (TB, S)

    # ---- weighted pooling on VPU + sublane reduce (avoid M=1 MXU matmul) ----
    context = jnp.sum(attn[:, :, None] * x, axis=1)                  # (TB, D) f32

    # ---- tiny output head ----
    out = jnp.dot(context, w_out_ref[...],
                  preferred_element_type=jnp.float32) + b_out_ref[...]   # (TB, 4)

    out_ref[...] = out.reshape(tb, 1, N_OUT).astype(out_ref.dtype)
    attn_ref[...] = attn.reshape(tb, 1, s).astype(attn_ref.dtype)


def aspect_attention(x, w_in_t, w_i_row, w_out_t, b_out, *,
                     block_b=None, target_rows=512):
    """x: (B, S, D) f32.
    w_in_t:  (D, D)   = W_in^T   (cast to bf16 internally for the MXU matmul)
    w_i_row: (1, D)   = W_i (PyTorch nn.Linear(768,1).weight, as-is)
    w_out_t: (D, 4)   = W_out^T
    b_out:   (1, 4)
    Returns (output (B,1,4), attn (B,1,S)) in f32.
    """
    B, S, D = x.shape
    assert D == D_MODEL

    if block_b is None:
        # Fill the MXU M dimension (~target_rows rows/step) while keeping the
        # f32 x block + f32 h intermediate (~8 bytes/elem) under ~8 MiB so the
        # kernel fits comfortably even on v7x's 64 MiB VMEM with double buffers.
        rows_budget = (8 << 20) // (8 * D)                 # ~1365 rows
        rows_per_block = max(S, min(target_rows, rows_budget))
        block_b = max(1, min(B, rows_per_block // max(S, 1)))
    grid_b = pl.cdiv(B, block_b)

    w_in_bf16 = w_in_t.astype(jnp.bfloat16)

    # Advisory cost estimate for the XLA scheduler.
    flops = 2 * B * S * D * D + 4 * B * S * D + 2 * B * D * N_OUT
    transcendentals = B * S * D + B * S                    # tanh + exp
    bytes_accessed = (x.size * 4 + w_in_bf16.size * 2 + w_i_row.size * 4
                      + w_out_t.size * 4 + b_out.size * 4
                      + B * N_OUT * 4 + B * S * 4)
    cost = pl.CostEstimate(flops=flops, transcendentals=transcendentals,
                           bytes_accessed=bytes_accessed)

    grid_spec = pltpu.PrefetchScalarGridSpec(
        num_scalar_prefetch=0,
        grid=(grid_b,),
        in_specs=[
            pl.BlockSpec((block_b, S, D), lambda b: (b, 0, 0)),   # x
            pl.BlockSpec((D, D), lambda b: (0, 0)),               # W_in^T (bf16)
            pl.BlockSpec((1, D), lambda b: (0, 0)),               # W_i row (f32)
            pl.BlockSpec((D, N_OUT), lambda b: (0, 0)),           # W_out^T (f32)
            pl.BlockSpec((1, N_OUT), lambda b: (0, 0)),           # b_out
        ],
        out_specs=[
            pl.BlockSpec((block_b, 1, N_OUT), lambda b: (b, 0, 0)),  # output
            pl.BlockSpec((block_b, 1, S), lambda b: (b, 0, 0)),      # attn^T
        ],
    )

    return pl.pallas_call(
        aspect_attention_kernel,
        out_shape=(
            jax.ShapeDtypeStruct((B, 1, N_OUT), jnp.float32),
            jax.ShapeDtypeStruct((B, 1, S), jnp.float32),
        ),
        grid_spec=grid_spec,
        compiler_params=pltpu.CompilerParams(
            dimension_semantics=("parallel",)),
        cost_estimate=cost,
    )(x, w_in_bf16, w_i_row, w_out_t, b_out)


def reference(x, w_in_t, w_i_row, w_out_t, b_out):
    """Pure-f32 JAX reference matching the PyTorch forward."""
    a = jnp.tanh(jnp.einsum("bsd,de->bse", x, w_in_t))               # (B,S,D)
    a = jnp.einsum("bsd,d->bs", a, w_i_row[0])[..., None]            # (B,S,1)
    a = jax.nn.softmax(a, axis=1)
    context = jnp.einsum("bsd,bse->bed", x, a)                       # (B,1,D)
    out = jnp.einsum("bod,de->boe", context, w_out_t) + b_out[None]  # (B,1,4)
    return out, jnp.swapaxes(a, 1, 2)


if __name__ == "__main__":
    key = jax.random.PRNGKey(0)
    k_x, k1, k2, k3, k4 = jax.random.split(key, 5)

    B, S = 2, 8

    # PyTorch Linear-style uniform +/- 1/sqrt(fan_in), pre-arranged for the kernel.
    bound = 1.0 / np.sqrt(D_MODEL)
    x = jax.random.normal(k_x, (B, S, D_MODEL), dtype=jnp.float32)
    w_in_t = jax.random.uniform(k1, (D_MODEL, D_MODEL), jnp.float32, -bound, bound)
    w_i_row = jax.random.uniform(k2, (1, D_MODEL), jnp.float32, -bound, bound)
    w_out_t = jax.random.uniform(k3, (D_MODEL, N_OUT), jnp.float32, -bound, bound)
    b_out = jax.random.uniform(k4, (1, N_OUT), jnp.float32, -bound, bound)

    out, attn = aspect_attention(x, w_in_t, w_i_row, w_out_t, b_out)
    out, attn = jax.block_until_ready((out, attn))

    ref_out, ref_attn = reference(x, w_in_t, w_i_row, w_out_t, b_out)
    # Tolerances loosened vs. the pure-f32 revision because the dominant matmul
    # now uses bf16 operands (f32 accumulation).
    np.testing.assert_allclose(np.asarray(out), np.asarray(ref_out),
                               rtol=2e-2, atol=5e-3)
    np.testing.assert_allclose(np.asarray(attn), np.asarray(ref_attn),
                               rtol=2e-2, atol=5e-3)

    assert out.shape == (B, 1, N_OUT) and attn.shape == (B, 1, S)
    print("KERNEL_OK")
</pallas_src>

<mosaic_0001>
module attributes {stable_mosaic.version = 11 : i64} {
  func.func @aspect_attention_kernel(%arg0: i32, %arg1: memref<2x8x768xf32, #tpu.memory_space<vmem>>, %arg2: memref<768x768xbf16, #tpu.memory_space<vmem>>, %arg3: memref<1x768xf32, #tpu.memory_space<vmem>>, %arg4: memref<768x4xf32, #tpu.memory_space<vmem>>, %arg5: memref<1x4xf32, #tpu.memory_space<vmem>>, %arg6: memref<2x1x4xf32, #tpu.memory_space<vmem>>, %arg7: memref<2x1x8xf32, #tpu.memory_space<vmem>>) attributes {dimension_semantics = [#tpu.dimension_semantics<parallel>], iteration_bounds = array<i64: 1>, scalar_prefetch = 0 : i64, scratch_operands = 0 : i64, tpu.core_type = #tpu.core_type<tc>, window_params = [{transform_indices = @transform_0, window_bounds = array<i64: 2, 8, 768>}, {pipeline_mode = #tpu.pipeline_mode<synchronous>, transform_indices = @transform_1, window_bounds = array<i64: 768, 768>}, {pipeline_mode = #tpu.pipeline_mode<synchronous>, transform_indices = @transform_2, window_bounds = array<i64: 1, 768>}, {pipeline_mode = #tpu.pipeline_mode<synchronous>, transform_indices = @transform_3, window_bounds = array<i64: 768, 4>}, {pipeline_mode = #tpu.pipeline_mode<synchronous>, transform_indices = @transform_4, window_bounds = array<i64: 1, 4>}, {transform_indices = @transform_5, window_bounds = array<i64: 2, 1, 4>}, {transform_indices = @transform_6, window_bounds = array<i64: 2, 1, 8>}]} {
    %c0 = arith.constant 0 : index
    %c0_0 = arith.constant 0 : index
    %c0_1 = arith.constant 0 : index
    %0 = vector.load %arg1[%c0, %c0_0, %c0_1] : memref<2x8x768xf32, #tpu.memory_space<vmem>>, vector<2x8x768xf32>
    %1 = vector.shape_cast %0 : vector<2x8x768xf32> to vector<16x768xf32>
    %2 = arith.truncf %1 : vector<16x768xf32> to vector<16x768xbf16>
    %c0_2 = arith.constant 0 : index
    %c0_3 = arith.constant 0 : index
    %3 = vector.load %arg2[%c0_2, %c0_3] : memref<768x768xbf16, #tpu.memory_space<vmem>>, vector<768x768xbf16>
    %cst = arith.constant dense<0.000000e+00> : vector<16x768xf32>
    %4 = tpu.matmul %2, %3, %cst {dimension_numbers = #tpu.dot_dimension_numbers<[1], [0], [0], [1], [0, 0, 1, 1], [], []>} : vector<16x768xbf16>, vector<768x768xbf16>, vector<16x768xf32> -> vector<16x768xf32>
    %5 = math.tanh %4 : vector<16x768xf32>
    %6 = vector.shape_cast %5 : vector<16x768xf32> to vector<2x8x768xf32>
    %c0_4 = arith.constant 0 : index
    %c0_5 = arith.constant 0 : index
    %7 = vector.load %arg3[%c0_4, %c0_5] : memref<1x768xf32, #tpu.memory_space<vmem>>, vector<1x768xf32>
    %8 = vector.shape_cast %7 : vector<1x768xf32> to vector<1x1x768xf32>
    %9 = vector.broadcast %8 : vector<1x1x768xf32> to vector<2x8x768xf32>
    %10 = arith.mulf %6, %9 : vector<2x8x768xf32>
    %cst_6 = arith.constant dense<0.000000e+00> : vector<2x8xf32>
    %11 = vector.multi_reduction <add>, %10, %cst_6 [2] : vector<2x8x768xf32> to vector<2x8xf32>
    %cst_7 = arith.constant dense<0xFF800000> : vector<2xf32>
    %12 = vector.multi_reduction <maximumf>, %11, %cst_7 [1] : vector<2x8xf32> to vector<2xf32>
    %13 = vector.shape_cast %12 : vector<2xf32> to vector<2x1xf32>
    %14 = vector.broadcast %13 : vector<2x1xf32> to vector<2x8xf32>
    %15 = arith.subf %11, %14 : vector<2x8xf32>
    %16 = math.exp %15 : vector<2x8xf32>
    %cst_8 = arith.constant dense<0.000000e+00> : vector<2xf32>
    %17 = vector.multi_reduction <add>, %16, %cst_8 [1] : vector<2x8xf32> to vector<2xf32>
    %18 = vector.shape_cast %17 : vector<2xf32> to vector<2x1xf32>
    %19 = tpu.reciprocal %18 {approx = true} : vector<2x1xf32> -> vector<2x1xf32>
    %20 = vector.broadcast %19 : vector<2x1xf32> to vector<2x8xf32>
    %21 = arith.mulf %16, %20 : vector<2x8xf32>
    %22 = vector.shape_cast %21 : vector<2x8xf32> to vector<2x8x1xf32>
    %23 = vector.broadcast %22 : vector<2x8x1xf32> to vector<2x8x768xf32>
    %24 = arith.mulf %23, %0 : vector<2x8x768xf32>
    %cst_9 = arith.constant dense<0.000000e+00> : vector<2x768xf32>
    %25 = vector.multi_reduction <add>, %24, %cst_9 [1] : vector<2x8x768xf32> to vector<2x768xf32>
    %c0_10 = arith.constant 0 : index
    %c0_11 = arith.constant 0 : index
    %26 = vector.load %arg4[%c0_10, %c0_11] : memref<768x4xf32, #tpu.memory_space<vmem>>, vector<768x4xf32>
    %cst_12 = arith.constant dense<0.000000e+00> : vector<2x4xf32>
    %27 = tpu.matmul %25, %26, %cst_12 {dimension_numbers = #tpu.dot_dimension_numbers<[1], [0], [0], [1], [0, 0, 1, 1], [], []>} : vector<2x768xf32>, vector<768x4xf32>, vector<2x4xf32> -> vector<2x4xf32>
    %c0_13 = arith.constant 0 : index
    %c0_14 = arith.constant 0 : index
    %28 = vector.load %arg5[%c0_13, %c0_14] : memref<1x4xf32, #tpu.memory_space<vmem>>, vector<1x4xf32>
    %29 = vector.broadcast %28 : vector<1x4xf32> to vector<2x4xf32>
    %30 = arith.addf %27, %29 : vector<2x4xf32>
    %31 = vector.shape_cast %30 : vector<2x4xf32> to vector<2x1x4xf32>
    %c0_15 = arith.constant 0 : index
    %c0_16 = arith.constant 0 : index
    %c0_17 = arith.constant 0 : index
    %32 = vector.load %arg6[%c0_15, %c0_16, %c0_17] : memref<2x1x4xf32, #tpu.memory_space<vmem>>, vector<2x1x4xf32>
    tpu.vector_store %arg6[%c0_15, %c0_16, %c0_17], %31 {strides = array<i32>} : memref<2x1x4xf32, #tpu.memory_space<vmem>>, vector<2x1x4xf32>,
    %33 = vector.shape_cast %21 : vector<2x8xf32> to vector<2x1x8xf32>
    %c0_18 = arith.constant 0 : index
    %c0_19 = arith.constant 0 : index
    %c0_20 = arith.constant 0 : index
    %34 = vector.load %arg7[%c0_18, %c0_19, %c0_20] : memref<2x1x8xf32, #tpu.memory_space<vmem>>, vector<2x1x8xf32>
    tpu.vector_store %arg7[%c0_18, %c0_19, %c0_20], %33 {strides = array<i32>} : memref<2x1x8xf32, #tpu.memory_space<vmem>>, vector<2x1x8xf32>,
    return
  }
  func.func @transform_0(%arg0: i32) -> (i32, i32, i32) {
    %c0_i32 = arith.constant 0 : i32
    %c0_i32_0 = arith.constant 0 : i32
    %c0_i32_1 = arith.constant 0 : i32
    return %arg0, %c0_i32, %c0_i32_0 : i32, i32, i32
  }
  func.func @transform_1(%arg0: i32) -> (i32, i32) {
    %c0_i32 = arith.constant 0 : i32
    %c0_i32_0 = arith.constant 0 : i32
    %c0_i32_1 = arith.constant 0 : i32
    return %c0_i32, %c0_i32_0 : i32, i32
  }
  func.func @transform_2(%arg0: i32) -> (i32, i32) {
    %c0_i32 = arith.constant 0 : i32
    %c0_i32_0 = arith.constant 0 : i32
    %c0_i32_1 = arith.constant 0 : i32
    return %c0_i32, %c0_i32_0 : i32, i32
  }
  func.func @transform_3(%arg0: i32) -> (i32, i32) {
    %c0_i32 = arith.constant 0 : i32
    %c0_i32_0 = arith.constant 0 : i32
    %c0_i32_1 = arith.constant 0 : i32
    return %c0_i32, %c0_i32_0 : i32, i32
  }
  func.func @transform_4(%arg0: i32) -> (i32, i32) {
    %c0_i32 = arith.constant 0 : i32
    %c0_i32_0 = arith.constant 0 : i32
    %c0_i32_1 = arith.constant 0 : i32
    return %c0_i32, %c0_i32_0 : i32, i32
  }
  func.func @transform_5(%arg0: i32) -> (i32, i32, i32) {
    %c0_i32 = arith.constant 0 : i32
    %c0_i32_0 = arith.constant 0 : i32
    %c0_i32_1 = arith.constant 0 : i32
    return %arg0, %c0_i32, %c0_i32_0 : i32, i32, i32
  }
  func.func @transform_6(%arg0: i32) -> (i32, i32, i32) {
    %c0_i32 = arith.constant 0 : i32
    %c0_i32_0 = arith.constant 0 : i32
    %c0_i32_1 = arith.constant 0 : i32
    return %arg0, %c0_i32, %c0_i32_0 : i32, i32, i32
  }
}

</mosaic_0001>

<llo_original>
// kernel: tpu_custom_call.1
$region0: #{tpu_custom_call.1}
  #allocation0 [shape = 'u32[]', space=smem, size = 0x4, offset = 0x4, fixed_abs, tag = 'smem constant byte address 0x4 - core index']
  #allocation1 [shape = 'u32[72,128]{1,0:T(1,128)}', space=vmem, size = 0x9000, scoped, tag = 'internal scratch']
  %s0 = inlined_call_operand.hbm [shape: f32[2,8,768], index: 0, kind: input, shape index: {}]
  %s1 = inlined_call_operand.hbm [shape: bf16[768,768], index: 1, kind: input, shape index: {}]
  %s2 = inlined_call_operand.hbm [shape: f32[1,768], index: 2, kind: input, shape index: {}]
  %s3 = inlined_call_operand.vmem [shape: f32[768,4], index: 3, kind: input, shape index: {}]
  %s4 = inlined_call_operand.hbm [shape: f32[1,4], index: 4, kind: input, shape index: {}]
  %s5 = inlined_call_operand.hbm [shape: f32[2,1,4], index: 5, kind: output, shape index: {0}]
  %s6 = inlined_call_operand.hbm [shape: f32[2,1,8], index: 6, kind: output, shape index: {1}]
  %7 = xla_tuple %s5, %s6
  %s8 = sld [smem:[#allocation0]]
  $region54: #{tpu_custom_call.1} parent=0
    _
  %s10 = ssub.s32 1, %s8
  %s11 = scalar_select 0, %s10, %s8
  $region1: #{tpu_custom_call.1} parent=0
    #allocation2 [shape = 'u8[49152]{0}', space=vmem, size = 0xc000, scoped, tag = 'input window, operand 0, single buffered']
    #allocation3 [shape = 's32[1]{0}', space=sflag, size = 0x4, scoped, tag = 'scoped memory for tpu_custom_call.1']
    #allocation4 [shape = 's32[1]{0}', space=sflag, size = 0x4, scoped, tag = 'scoped memory for tpu_custom_call.1']
    #allocation5 [shape = 'u8[1179648]{0}', space=vmem, size = 0x120000, scoped, tag = 'input window, operand 1, single buffered']
    #allocation6 [shape = 's32[1]{0}', space=sflag, size = 0x4, scoped, tag = 'scoped memory for tpu_custom_call.1']
    #allocation7 [shape = 'u8[3072]{0}', space=vmem, size = 0xc00, scoped, tag = 'input window, operand 2, single buffered']
    #allocation8 [shape = 'u8[512]{0}', space=vmem, size = 0x400, scoped, tag = 'input window, operand 4, single buffered']
    #allocation9 [shape = 's32[1]{0}', space=sflag, size = 0x4, scoped, tag = 'scoped memory for tpu_custom_call.1']
    #allocation10 [shape = 'u8[1024]{0}', space=vmem, size = 0x400, scoped, tag = 'output window, operand 0, single buffered']
    #allocation11 [shape = 'u8[1024]{0}', space=vmem, size = 0x400, scoped, tag = 'output window, operand 1, single buffered']
    #allocation12 [shape = 's32[1]{0}', space=sflag, size = 0x4, scoped, tag = 'scoped memory for tpu_custom_call.1']
    %12 = vsyncpa [#allocation3], 0
    %13 = vsyncpa [#allocation6], 0
    %14 = vsyncpa [#allocation9], 0
    %15 = vsyncpa [#allocation4], 0
    %16 = vsyncpa [#allocation12], 0
    // Predicated region
    $region2: #{tpu_custom_call.1} parent=1 // pred_check
      _
    $region3: #{tpu_custom_call.1} parent=1 // pred_check_branch
      %18 = sbr.rel (0) target = $region5
    $region4: #{tpu_custom_call.1} parent=1 // pred_region
      %20 = vsyncadd [#allocation3], 0
      %s21 = sshll.u32 %s0, 4
      %s22 = int_to_ptr.hbm [resolvable:$true] %s21
      %s23 = sshll.u32 [#allocation2], 4
      %s24 = int_to_ptr.vmem [resolvable:$true] %s23
      %29 = dma.hbm_to_vmem [thread:$0]  %s22, 1536, %s24, [#allocation3], 768, 768, 48
    $region5: #{tpu_custom_call.1} parent=1 // pred_fallthru
      _
    // Predicated region
    $region6: #{tpu_custom_call.1} parent=1 // pred_check
      _
    $region7: #{tpu_custom_call.1} parent=1 // pred_check_branch
      %31 = sbr.rel (0) target = $region9
    $region8: #{tpu_custom_call.1} parent=1 // pred_region
      %33 = vsyncadd [#allocation6], 0
      %s34 = sshll.u32 %s1, 4
      %s35 = int_to_ptr.hbm [resolvable:$true] %s34
      %s36 = sshll.u32 [#allocation5], 4
      %s37 = int_to_ptr.vmem [resolvable:$true] %s36
      %42 = dma.hbm_to_vmem [thread:$0]  %s35, 36864, %s37, [#allocation6], 384, 384, 24
    $region9: #{tpu_custom_call.1} parent=1 // pred_fallthru
      _
    // Predicated region
    $region10: #{tpu_custom_call.1} parent=1 // pred_check
      _
    $region11: #{tpu_custom_call.1} parent=1 // pred_check_branch
      %44 = sbr.rel (0) target = $region13
    $region12: #{tpu_custom_call.1} parent=1 // pred_region
      %46 = vsyncadd [#allocation6], 0
      %s48 = sshll.u32 %s2, 4
      %s49 = int_to_ptr.hbm [resolvable:$true] %s48
      %s50 = sshll.u32 [#allocation7], 4
      %s51 = int_to_ptr.vmem [resolvable:$true] %s50
      %53 = dma.hbm_to_vmem [thread:$0]  %s49, 96, %s51, [#allocation6]
    $region13: #{tpu_custom_call.1} parent=1 // pred_fallthru
      _
    // Predicated region
    $region14: #{tpu_custom_call.1} parent=1 // pred_check
      _
    $region15: #{tpu_custom_call.1} parent=1 // pred_check_branch
      %55 = sbr.rel (0) target = $region17
    $region16: #{tpu_custom_call.1} parent=1 // pred_region
      _
    $region17: #{tpu_custom_call.1} parent=1 // pred_fallthru
      _
    // Predicated region
    $region18: #{tpu_custom_call.1} parent=1 // pred_check
      _
    $region19: #{tpu_custom_call.1} parent=1 // pred_check_branch
      %57 = sbr.rel (0) target = $region21
    $region20: #{tpu_custom_call.1} parent=1 // pred_region
      %59 = vsyncadd [#allocation9], 0
      %s61 = sshll.u32 %s4, 4
      %s62 = int_to_ptr.hbm [resolvable:$true] %s61
      %s63 = sshll.u32 [#allocation8], 4
      %s64 = int_to_ptr.vmem [resolvable:$true] %s63
      %66 = dma.hbm_to_vmem [thread:$0]  %s62, 16, %s64, [#allocation9]
    $region21: #{tpu_custom_call.1} parent=1 // pred_fallthru
      _
    // Predicated region
    $region22: #{tpu_custom_call.1} parent=1 // pred_check
      _
    $region23: #{tpu_custom_call.1} parent=1 // pred_check_branch
      %68 = sbr.rel (0) target = $region25
    $region24: #{tpu_custom_call.1} parent=1 // pred_region
      %70 = dma.done [#allocation3], 1536
    $region25: #{tpu_custom_call.1} parent=1 // pred_fallthru
      _
    // Predicated region
    $region26: #{tpu_custom_call.1} parent=1 // pred_check
      _
    $region27: #{tpu_custom_call.1} parent=1 // pred_check_branch
      %72 = sbr.rel (0) target = $region29
    $region28: #{tpu_custom_call.1} parent=1 // pred_region
      %74 = dma.done [#allocation6], 36864
    $region29: #{tpu_custom_call.1} parent=1 // pred_fallthru
      _
    // Predicated region
    $region30: #{tpu_custom_call.1} parent=1 // pred_check
      _
    $region31: #{tpu_custom_call.1} parent=1 // pred_check_branch
      %76 = sbr.rel (0) target = $region33
    $region32: #{tpu_custom_call.1} parent=1 // pred_region
      %78 = dma.done [#allocation6], 96
    $region33: #{tpu_custom_call.1} parent=1 // pred_fallthru
      _
    // Predicated region
    $region34: #{tpu_custom_call.1} parent=1 // pred_check
      _
    $region35: #{tpu_custom_call.1} parent=1 // pred_check_branch
      %80 = sbr.rel (0) target = $region37
    $region36: #{tpu_custom_call.1} parent=1 // pred_region
      %82 = dma.done [#allocation9], 16
    $region37: #{tpu_custom_call.1} parent=1 // pred_fallthru
      _
    %v83 = vld [vmem:[#allocation2] sm:$0xff]
    %v84 = vld [vmem:[#allocation2 + $0x8] sm:$0xff]
    %v85 = vld [vmem:[#allocation2 + $0x10] sm:$0xff]
    %v86 = vld [vmem:[#allocation2 + $0x18] sm:$0xff]
    %v87 = vld [vmem:[#allocation2 + $0x20] sm:$0xff]
    %v88 = vld [vmem:[#allocation2 + $0x28] sm:$0xff]
    %v89 = vld [vmem:[#allocation2 + $0x30] sm:$0xff]
    %v90 = vld [vmem:[#allocation2 + $0x38] sm:$0xff]
    %v91 = vld [vmem:[#allocation2 + $0x40] sm:$0xff]
    %v92 = vld [vmem:[#allocation2 + $0x48] sm:$0xff]
    %v93 = vld [vmem:[#allocation2 + $0x50] sm:$0xff]
    %v94 = vld [vmem:[#allocation2 + $0x58] sm:$0xff]
    %v95 = vpack.c.bf16 %v89, %v83
    %v96 = vpack.c.bf16 %v90, %v84
    %v97 = vpack.c.bf16 %v91, %v85
    %v98 = vpack.c.bf16 %v92, %v86
    %v99 = vpack.c.bf16 %v93, %v87
    %v100 = vpack.c.bf16 %v94, %v88
    %v101 = vld [vmem:[#allocation5] sm:$0xff]
    %v102 = vld [vmem:[#allocation5 + $0x8] sm:$0xff]
    %v103 = vld [vmem:[#allocation5 + $0x10] sm:$0xff]
    %v104 = vld [vmem:[#allocation5 + $0x18] sm:$0xff]
    %v105 = vld [vmem:[#allocation5 + $0x20] sm:$0xff]
    %v106 = vld [vmem:[#allocation5 + $0x28] sm:$0xff]
    %v107 = vld [vmem:[#allocation5 + $0x30] sm:$0xff]
    %v108 = vld [vmem:[#allocation5 + $0x38] sm:$0xff]
    %v109 = vld [vmem:[#allocation5 + $0x40] sm:$0xff]
    %v110 = vld [vmem:[#allocation5 + $0x48] sm:$0xff]
    %v111 = vld [vmem:[#allocation5 + $0x50] sm:$0xff]
    %v112 = vld [vmem:[#allocation5 + $0x58] sm:$0xff]
    %v113 = vld [vmem:[#allocation5 + $0x60] sm:$0xff]
    %v114 = vld [vmem:[#allocation5 + $0x68] sm:$0xff]
    %v115 = vld [vmem:[#allocation5 + $0x70] sm:$0xff]
    %v116 = vld [vmem:[#allocation5 + $0x78] sm:$0xff]
    %v117 = vld [vmem:[#allocation5 + $0x80] sm:$0xff]
    %v118 = vld [vmem:[#allocation5 + $0x88] sm:$0xff]
    %v119 = vld [vmem:[#allocation5 + $0x90] sm:$0xff]
    %v120 = vld [vmem:[#allocation5 + $0x98] sm:$0xff]
    %v121 = vld [vmem:[#allocation5 + $0xa0] sm:$0xff]
    %v122 = vld [vmem:[#allocation5 + $0xa8] sm:$0xff]
    %v123 = vld [vmem:[#allocation5 + $0xb0] sm:$0xff]
    %v124 = vld [vmem:[#allocation5 + $0xb8] sm:$0xff]
    %v125 = vld [vmem:[#allocation5 + $0xc0] sm:$0xff]
    %v126 = vld [vmem:[#allocation5 + $0xc8] sm:$0xff]
    %v127 = vld [vmem:[#allocation5 + $0xd0] sm:$0xff]
    %v128 = vld [vmem:[#allocation5 + $0xd8] sm:$0xff]
    %v129 = vld [vmem:[#allocation5 + $0xe0] sm:$0xff]
    %v130 = vld [vmem:[#allocation5 + $0xe8] sm:$0xff]
    %v131 = vld [vmem:[#allocation5 + $0xf0] sm:$0xff]
    %v132 = vld [vmem:[#allocation5 + $0xf8] sm:$0xff]
    %v133 = vld [vmem:[#allocation5 + $0x100] sm:$0xff]
    %v134 = vld [vmem:[#allocation5 + $0x108] sm:$0xff]
    %v135 = vld [vmem:[#allocation5 + $0x110] sm:$0xff]
    %v136 = vld [vmem:[#allocation5 + $0x118] sm:$0xff]
    %v137 = vld [vmem:[#allocation5 + $0x120] sm:$0xff]
    %v138 = vld [vmem:[#allocation5 + $0x128] sm:$0xff]
    %v139 = vld [vmem:[#allocation5 + $0x130] sm:$0xff]
    %v140 = vld [vmem:[#allocation5 + $0x138] sm:$0xff]
    %v141 = vld [vmem:[#allocation5 + $0x140] sm:$0xff]
    %v142 = vld [vmem:[#allocation5 + $0x148] sm:$0xff]
    %v143 = vld [vmem:[#allocation5 + $0x150] sm:$0xff]
    %v144 = vld [vmem:[#allocation5 + $0x158] sm:$0xff]
    %v145 = vld [vmem:[#allocation5 + $0x160] sm:$0xff]
    %v146 = vld [vmem:[#allocation5 + $0x168] sm:$0xff]
    %v147 = vld [vmem:[#allocation5 + $0x170] sm:$0xff]
    %v148 = vld [vmem:[#allocation5 + $0x178] sm:$0xff]
    %v149 = vld [vmem:[#allocation5 + $0x180] sm:$0xff]
    %v150 = vld [vmem:[#allocation5 + $0x188] sm:$0xff]
    %v151 = vld [vmem:[#allocation5 + $0x190] sm:$0xff]
    %v152 = vld [vmem:[#allocation5 + $0x198] sm:$0xff]
    %v153 = vld [vmem:[#allocation5 + $0x1a0] sm:$0xff]
    %v154 = vld [vmem:[#allocation5 + $0x1a8] sm:$0xff]
    %v155 = vld [vmem:[#allocation5 + $0x1b0] sm:$0xff]
    %v156 = vld [vmem:[#allocation5 + $0x1b8] sm:$0xff]
    %v157 = vld [vmem:[#allocation5 + $0x1c0] sm:$0xff]
    %v158 = vld [vmem:[#allocation5 + $0x1c8] sm:$0xff]
    %v159 = vld [vmem:[#allocation5 + $0x1d0] sm:$0xff]
    %v160 = vld [vmem:[#allocation5 + $0x1d8] sm:$0xff]
    %v161 = vld [vmem:[#allocation5 + $0x1e0] sm:$0xff]
    %v162 = vld [vmem:[#allocation5 + $0x1e8] sm:$0xff]
    %v163 = vld [vmem:[#allocation5 + $0x1f0] sm:$0xff]
    %v164 = vld [vmem:[#allocation5 + $0x1f8] sm:$0xff]
    %v165 = vld [vmem:[#allocation5 + $0x200] sm:$0xff]
    %v166 = vld [vmem:[#allocation5 + $0x208] sm:$0xff]
    %v167 = vld [vmem:[#allocation5 + $0x210] sm:$0xff]
    %v168 = vld [vmem:[#allocation5 + $0x218] sm:$0xff]
    %v169 = vld [vmem:[#allocation5 + $0x220] sm:$0xff]
    %v170 = vld [vmem:[#allocation5 + $0x228] sm:$0xff]
    %v171 = vld [vmem:[#allocation5 + $0x230] sm:$0xff]
    %v172 = vld [vmem:[#allocation5 + $0x238] sm:$0xff]
    %v173 = vld [vmem:[#allocation5 + $0x240] sm:$0xff]
    %v174 = vld [vmem:[#allocation5 + $0x248] sm:$0xff]
    %v175 = vld [vmem:[#allocation5 + $0x250] sm:$0xff]
    %v176 = vld [vmem:[#allocation5 + $0x258] sm:$0xff]
    %v177 = vld [vmem:[#allocation5 + $0x260] sm:$0xff]
    %v178 = vld [vmem:[#allocation5 + $0x268] sm:$0xff]
    %v179 = vld [vmem:[#allocation5 + $0x270] sm:$0xff]
    %v180 = vld [vmem:[#allocation5 + $0x278] sm:$0xff]
    %v181 = vld [vmem:[#allocation5 + $0x280] sm:$0xff]
    %v182 = vld [vmem:[#allocation5 + $0x288] sm:$0xff]
    %v183 = vld [vmem:[#allocation5 + $0x290] sm:$0xff]
    %v184 = vld [vmem:[#allocation5 + $0x298] sm:$0xff]
    %v185 = vld [vmem:[#allocation5 + $0x2a0] sm:$0xff]
    %v186 = vld [vmem:[#allocation5 + $0x2a8] sm:$0xff]
    %v187 = vld [vmem:[#allocation5 + $0x2b0] sm:$0xff]
    %v188 = vld [vmem:[#allocation5 + $0x2b8] sm:$0xff]
    %v189 = vld [vmem:[#allocation5 + $0x2c0] sm:$0xff]
    %v190 = vld [vmem:[#allocation5 + $0x2c8] sm:$0xff]
    %v191 = vld [vmem:[#allocation5 + $0x2d0] sm:$0xff]
    %v192 = vld [vmem:[#allocation5 + $0x2d8] sm:$0xff]
    %v193 = vld [vmem:[#allocation5 + $0x2e0] sm:$0xff]
    %v194 = vld [vmem:[#allocation5 + $0x2e8] sm:$0xff]
    %v195 = vld [vmem:[#allocation5 + $0x2f0] sm:$0xff]
    %v196 = vld [vmem:[#allocation5 + $0x2f8] sm:$0xff]
    %v197 = vld [vmem:[#allocation5 + $0x300] sm:$0xff]
    %v198 = vld [vmem:[#allocation5 + $0x308] sm:$0xff]
    %v199 = vld [vmem:[#allocation5 + $0x310] sm:$0xff]
    %v200 = vld [vmem:[#allocation5 + $0x318] sm:$0xff]
    %v201 = vld [vmem:[#allocation5 + $0x320] sm:$0xff]
    %v202 = vld [vmem:[#allocation5 + $0x328] sm:$0xff]
    %v203 = vld [vmem:[#allocation5 + $0x330] sm:$0xff]
    %v204 = vld [vmem:[#allocation5 + $0x338] sm:$0xff]
    %v205 = vld [vmem:[#allocation5 + $0x340] sm:$0xff]
    %v206 = vld [vmem:[#allocation5 + $0x348] sm:$0xff]
    %v207 = vld [vmem:[#allocation5 + $0x350] sm:$0xff]
    %v208 = vld [vmem:[#allocation5 + $0x358] sm:$0xff]
    %v209 = vld [vmem:[#allocation5 + $0x360] sm:$0xff]
    %v210 = vld [vmem:[#allocation5 + $0x368] sm:$0xff]
    %v211 = vld [vmem:[#allocation5 + $0x370] sm:$0xff]
    %v212 = vld [vmem:[#allocation5 + $0x378] sm:$0xff]
    %v213 = vld [vmem:[#allocation5 + $0x380] sm:$0xff]
    %v214 = vld [vmem:[#allocation5 + $0x388] sm:$0xff]
    %v215 = vld [vmem:[#allocation5 + $0x390] sm:$0xff]
    %v216 = vld [vmem:[#allocation5 + $0x398] sm:$0xff]
    %v217 = vld [vmem:[#allocation5 + $0x3a0] sm:$0xff]
    %v218 = vld [vmem:[#allocation5 + $0x3a8] sm:$0xff]
    %v219 = vld [vmem:[#allocation5 + $0x3b0] sm:$0xff]
    %v220 = vld [vmem:[#allocation5 + $0x3b8] sm:$0xff]
    %v221 = vld [vmem:[#allocation5 + $0x3c0] sm:$0xff]
    %v222 = vld [vmem:[#allocation5 + $0x3c8] sm:$0xff]
    %v223 = vld [vmem:[#allocation5 + $0x3d0] sm:$0xff]
    %v224 = vld [vmem:[#allocation5 + $0x3d8] sm:$0xff]
    %v225 = vld [vmem:[#allocation5 + $0x3e0] sm:$0xff]
    %v226 = vld [vmem:[#allocation5 + $0x3e8] sm:$0xff]
    %v227 = vld [vmem:[#allocation5 + $0x3f0] sm:$0xff]
    %v228 = vld [vmem:[#allocation5 + $0x3f8] sm:$0xff]
    %v229 = vld [vmem:[#allocation5 + $0x400] sm:$0xff]
    %v230 = vld [vmem:[#allocation5 + $0x408] sm:$0xff]
    %v231 = vld [vmem:[#allocation5 + $0x410] sm:$0xff]
    %v232 = vld [vmem:[#allocation5 + $0x418] sm:$0xff]
    %v233 = vld [vmem:[#allocation5 + $0x420] sm:$0xff]
    %v234 = vld [vmem:[#allocation5 + $0x428] sm:$0xff]
    %v235 = vld [vmem:[#allocation5 + $0x430] sm:$0xff]
    %v236 = vld [vmem:[#allocation5 + $0x438] sm:$0xff]
    %v237 = vld [vmem:[#allocation5 + $0x440] sm:$0xff]
    %v238 = vld [vmem:[#allocation5 + $0x448] sm:$0xff]
    %v239 = vld [vmem:[#allocation5 + $0x450] sm:$0xff]
    %v240 = vld [vmem:[#allocation5 + $0x458] sm:$0xff]
    %v241 = vld [vmem:[#allocation5 + $0x460] sm:$0xff]
    %v242 = vld [vmem:[#allocation5 + $0x468] sm:$0xff]
    %v243 = vld [vmem:[#allocation5 + $0x470] sm:$0xff]
    %v244 = vld [vmem:[#allocation5 + $0x478] sm:$0xff]
    %v245 = vld [vmem:[#allocation5 + $0x480] sm:$0xff]
    %v246 = vld [vmem:[#allocation5 + $0x488] sm:$0xff]
    %v247 = vld [vmem:[#allocation5 + $0x490] sm:$0xff]
    %v248 = vld [vmem:[#allocation5 + $0x498] sm:$0xff]
    %v249 = vld [vmem:[#allocation5 + $0x4a0] sm:$0xff]
    %v250 = vld [vmem:[#allocation5 + $0x4a8] sm:$0xff]
    %v251 = vld [vmem:[#allocation5 + $0x4b0] sm:$0xff]
    %v252 = vld [vmem:[#allocation5 + $0x4b8] sm:$0xff]
    %v253 = vld [vmem:[#allocation5 + $0x4c0] sm:$0xff]
    %v254 = vld [vmem:[#allocation5 + $0x4c8] sm:$0xff]
    %v255 = vld [vmem:[#allocation5 + $0x4d0] sm:$0xff]
    %v256 = vld [vmem:[#allocation5 + $0x4d8] sm:$0xff]
    %v257 = vld [vmem:[#allocation5 + $0x4e0] sm:$0xff]
    %v258 = vld [vmem:[#allocation5 + $0x4e8] sm:$0xff]
    %v259 = vld [vmem:[#allocation5 + $0x4f0] sm:$0xff]
    %v260 = vld [vmem:[#allocation5 + $0x4f8] sm:$0xff]
    %v261 = vld [vmem:[#allocation5 + $0x500] sm:$0xff]
    %v262 = vld [vmem:[#allocation5 + $0x508] sm:$0xff]
    %v263 = vld [vmem:[#allocation5 + $0x510] sm:$0xff]
    %v264 = vld [vmem:[#allocation5 + $0x518] sm:$0xff]
    %v265 = vld [vmem:[#allocation5 + $0x520] sm:$0xff]
    %v266 = vld [vmem:[#allocation5 + $0x528] sm:$0xff]
    %v267 = vld [vmem:[#allocation5 + $0x530] sm:$0xff]
    %v268 = vld [vmem:[#allocation5 + $0x538] sm:$0xff]
    %v269 = vld [vmem:[#allocation5 + $0x540] sm:$0xff]
    %v270 = vld [vmem:[#allocation5 + $0x548] sm:$0xff]
    %v271 = vld [vmem:[#allocation5 + $0x550] sm:$0xff]
    %v272 = vld [vmem:[#allocation5 + $0x558] sm:$0xff]
    %v273 = vld [vmem:[#allocation5 + $0x560] sm:$0xff]
    %v274 = vld [vmem:[#allocation5 + $0x568] sm:$0xff]
    %v275 = vld [vmem:[#allocation5 + $0x570] sm:$0xff]
    %v276 = vld [vmem:[#allocation5 + $0x578] sm:$0xff]
    %v277 = vld [vmem:[#allocation5 + $0x580] sm:$0xff]
    %v278 = vld [vmem:[#allocation5 + $0x588] sm:$0xff]
    %v279 = vld [vmem:[#allocation5 + $0x590] sm:$0xff]
    %v280 = vld [vmem:[#allocation5 + $0x598] sm:$0xff]
    %v281 = vld [vmem:[#allocation5 + $0x5a0] sm:$0xff]
    %v282 = vld [vmem:[#allocation5 + $0x5a8] sm:$0xff]
    %v283 = vld [vmem:[#allocation5 + $0x5b0] sm:$0xff]
    %v284 = vld [vmem:[#allocation5 + $0x5b8] sm:$0xff]
    %v285 = vld [vmem:[#allocation5 + $0x5c0] sm:$0xff]
    %v286 = vld [vmem:[#allocation5 + $0x5c8] sm:$0xff]
    %v287 = vld [vmem:[#allocation5 + $0x5d0] sm:$0xff]
    %v288 = vld [vmem:[#allocation5 + $0x5d8] sm:$0xff]
    %v289 = vld [vmem:[#allocation5 + $0x5e0] sm:$0xff]
    %v290 = vld [vmem:[#allocation5 + $0x5e8] sm:$0xff]
    %v291 = vld [vmem:[#allocation5 + $0x5f0] sm:$0xff]
    %v292 = vld [vmem:[#allocation5 + $0x5f8] sm:$0xff]
    %v293 = vld [vmem:[#allocation5 + $0x600] sm:$0xff]
    %v294 = vld [vmem:[#allocation5 + $0x608] sm:$0xff]
    %v295 = vld [vmem:[#allocation5 + $0x610] sm:$0xff]
    %v296 = vld [vmem:[#allocation5 + $0x618] sm:$0xff]
    %v297 = vld [vmem:[#allocation5 + $0x620] sm:$0xff]
    %v298 = vld [vmem:[#allocation5 + $0x628] sm:$0xff]
    %v299 = vld [vmem:[#allocation5 + $0x630] sm:$0xff]
    %v300 = vld [vmem:[#allocation5 + $0x638] sm:$0xff]
    %v301 = vld [vmem:[#allocation5 + $0x640] sm:$0xff]
    %v302 = vld [vmem:[#allocation5 + $0x648] sm:$0xff]
    %v303 = vld [vmem:[#allocation5 + $0x650] sm:$0xff]
    %v304 = vld [vmem:[#allocation5 + $0x658] sm:$0xff]
    %v305 = vld [vmem:[#allocation5 + $0x660] sm:$0xff]
    %v306 = vld [vmem:[#allocation5 + $0x668] sm:$0xff]
    %v307 = vld [vmem:[#allocation5 + $0x670] sm:$0xff]
    %v308 = vld [vmem:[#allocation5 + $0x678] sm:$0xff]
    %v309 = vld [vmem:[#allocation5 + $0x680] sm:$0xff]
    %v310 = vld [vmem:[#allocation5 + $0x688] sm:$0xff]
    %v311 = vld [vmem:[#allocation5 + $0x690] sm:$0xff]
    %v312 = vld [vmem:[#allocation5 + $0x698] sm:$0xff]
    %v313 = vld [vmem:[#allocation5 + $0x6a0] sm:$0xff]
    %v314 = vld [vmem:[#allocation5 + $0x6a8] sm:$0xff]
    %v315 = vld [vmem:[#allocation5 + $0x6b0] sm:$0xff]
    %v316 = vld [vmem:[#allocation5 + $0x6b8] sm:$0xff]
    %v317 = vld [vmem:[#allocation5 + $0x6c0] sm:$0xff]
    %v318 = vld [vmem:[#allocation5 + $0x6c8] sm:$0xff]
    %v319 = vld [vmem:[#allocation5 + $0x6d0] sm:$0xff]
    %v320 = vld [vmem:[#allocation5 + $0x6d8] sm:$0xff]
    %v321 = vld [vmem:[#allocation5 + $0x6e0] sm:$0xff]
    %v322 = vld [vmem:[#allocation5 + $0x6e8] sm:$0xff]
    %v323 = vld [vmem:[#allocation5 + $0x6f0] sm:$0xff]
    %v324 = vld [vmem:[#allocation5 + $0x6f8] sm:$0xff]
    %v325 = vld [vmem:[#allocation5 + $0x700] sm:$0xff]
    %v326 = vld [vmem:[#allocation5 + $0x708] sm:$0xff]
    %v327 = vld [vmem:[#allocation5 + $0x710] sm:$0xff]
    %v328 = vld [vmem:[#allocation5 + $0x718] sm:$0xff]
    %v329 = vld [vmem:[#allocation5 + $0x720] sm:$0xff]
    %v330 = vld [vmem:[#allocation5 + $0x728] sm:$0xff]
    %v331 = vld [vmem:[#allocation5 + $0x730] sm:$0xff]
    %v332 = vld [vmem:[#allocation5 + $0x738] sm:$0xff]
    %v333 = vld [vmem:[#allocation5 + $0x740] sm:$0xff]
    %v334 = vld [vmem:[#allocation5 + $0x748] sm:$0xff]
    %v335 = vld [vmem:[#allocation5 + $0x750] sm:$0xff]
    %v336 = vld [vmem:[#allocation5 + $0x758] sm:$0xff]
    %v337 = vld [vmem:[#allocation5 + $0x760] sm:$0xff]
    %v338 = vld [vmem:[#allocation5 + $0x768] sm:$0xff]
    %v339 = vld [vmem:[#allocation5 + $0x770] sm:$0xff]
    %v340 = vld [vmem:[#allocation5 + $0x778] sm:$0xff]
    %v341 = vld [vmem:[#allocation5 + $0x780] sm:$0xff]
    %v342 = vld [vmem:[#allocation5 + $0x788] sm:$0xff]
    %v343 = vld [vmem:[#allocation5 + $0x790] sm:$0xff]
    %v344 = vld [vmem:[#allocation5 + $0x798] sm:$0xff]
    %v345 = vld [vmem:[#allocation5 + $0x7a0] sm:$0xff]
    %v346 = vld [vmem:[#allocation5 + $0x7a8] sm:$0xff]
    %v347 = vld [vmem:[#allocation5 + $0x7b0] sm:$0xff]
    %v348 = vld [vmem:[#allocation5 + $0x7b8] sm:$0xff]
    %v349 = vld [vmem:[#allocation5 + $0x7c0] sm:$0xff]
    %v350 = vld [vmem:[#allocation5 + $0x7c8] sm:$0xff]
    %v351 = vld [vmem:[#allocation5 + $0x7d0] sm:$0xff]
    %v352 = vld [vmem:[#allocation5 + $0x7d8] sm:$0xff]
    %v353 = vld [vmem:[#allocation5 + $0x7e0] sm:$0xff]
    %v354 = vld [vmem:[#allocation5 + $0x7e8] sm:$0xff]
    %v355 = vld [vmem:[#allocation5 + $0x7f0] sm:$0xff]
    %v356 = vld [vmem:[#allocation5 + $0x7f8] sm:$0xff]
    %v357 = vld [vmem:[#allocation5 + $0x800] sm:$0xff]
    %v358 = vld [vmem:[#allocation5 + $0x808] sm:$0xff]
    %v359 = vld [vmem:[#allocation5 + $0x810] sm:$0xff]
    %v360 = vld [vmem:[#allocation5 + $0x818] sm:$0xff]
    %v361 = vld [vmem:[#allocation5 + $0x820] sm:$0xff]
    %v362 = vld [vmem:[#allocation5 + $0x828] sm:$0xff]
    %v363 = vld [vmem:[#allocation5 + $0x830] sm:$0xff]
    %v364 = vld [vmem:[#allocation5 + $0x838] sm:$0xff]
    %v365 = vld [vmem:[#allocation5 + $0x840] sm:$0xff]
    %v366 = vld [vmem:[#allocation5 + $0x848] sm:$0xff]
    %v367 = vld [vmem:[#allocation5 + $0x850] sm:$0xff]
    %v368 = vld [vmem:[#allocation5 + $0x858] sm:$0xff]
    %v369 = vld [vmem:[#allocation5 + $0x860] sm:$0xff]
    %v370 = vld [vmem:[#allocation5 + $0x868] sm:$0xff]
    %v371 = vld [vmem:[#allocation5 + $0x870] sm:$0xff]
    %v372 = vld [vmem:[#allocation5 + $0x878] sm:$0xff]
    %v373 = vld [vmem:[#allocation5 + $0x880] sm:$0xff]
    %v374 = vld [vmem:[#allocation5 + $0x888] sm:$0xff]
    %v375 = vld [vmem:[#allocation5 + $0x890] sm:$0xff]
    %v376 = vld [vmem:[#allocation5 + $0x898] sm:$0xff]
    %v377 = vld [vmem:[#allocation5 + $0x8a0] sm:$0xff]
    %v378 = vld [vmem:[#allocation5 + $0x8a8] sm:$0xff]
    %v379 = vld [vmem:[#allocation5 + $0x8b0] sm:$0xff]
    %v380 = vld [vmem:[#allocation5 + $0x8b8] sm:$0xff]
    %v381 = vld [vmem:[#allocation5 + $0x8c0] sm:$0xff]
    %v382 = vld [vmem:[#allocation5 + $0x8c8] sm:$0xff]
    %v383 = vld [vmem:[#allocation5 + $0x8d0] sm:$0xff]
    %v384 = vld [vmem:[#allocation5 + $0x8d8] sm:$0xff]
    %v385 = vld [vmem:[#allocation5 + $0x8e0] sm:$0xff]
    %v386 = vld [vmem:[#allocation5 + $0x8e8] sm:$0xff]
    %v387 = vld [vmem:[#allocation5 + $0x8f0] sm:$0xff]
    %v388 = vld [vmem:[#allocation5 + $0x8f8] sm:$0xff]
    %v677 = vunpack.c.l.b16 %v101
    %v678 = vunpack.c.h.b16 %v101
    %v679 = vunpack.c.l.b16 %v102
    %v680 = vunpack.c.h.b16 %v102
    %v681 = vunpack.c.l.b16 %v103
    %v682 = vunpack.c.h.b16 %v103
    %v683 = vunpack.c.l.b16 %v104
    %v684 = vunpack.c.h.b16 %v104
    %v685 = vunpack.c.l.b16 %v105
    %v686 = vunpack.c.h.b16 %v105
    %v687 = vunpack.c.l.b16 %v106
    %v688 = vunpack.c.h.b16 %v106
    %v689 = vunpack.c.l.b16 %v107
    %v690 = vunpack.c.h.b16 %v107
    %v691 = vunpack.c.l.b16 %v108
    %v692 = vunpack.c.h.b16 %v108
    %v693 = vunpack.c.l.b16 %v109
    %v694 = vunpack.c.h.b16 %v109
    %v695 = vunpack.c.l.b16 %v110
    %v696 = vunpack.c.h.b16 %v110
    %v697 = vunpack.c.l.b16 %v111
    %v698 = vunpack.c.h.b16 %v111
    %v699 = vunpack.c.l.b16 %v112
    %v700 = vunpack.c.h.b16 %v112
    %v701 = vunpack.c.l.b16 %v113
    %v702 = vunpack.c.h.b16 %v113
    %v703 = vunpack.c.l.b16 %v114
    %v704 = vunpack.c.h.b16 %v114
    %v705 = vunpack.c.l.b16 %v115
    %v706 = vunpack.c.h.b16 %v115
    %v707 = vunpack.c.l.b16 %v116
    %v708 = vunpack.c.h.b16 %v116
    %v709 = vunpack.c.l.b16 %v117
    %v710 = vunpack.c.h.b16 %v117
    %v711 = vunpack.c.l.b16 %v118
    %v712 = vunpack.c.h.b16 %v118
    %v713 = vunpack.c.l.b16 %v119
    %v714 = vunpack.c.h.b16 %v119
    %v715 = vunpack.c.l.b16 %v120
    %v716 = vunpack.c.h.b16 %v120
    %v717 = vunpack.c.l.b16 %v121
    %v718 = vunpack.c.h.b16 %v121
    %v719 = vunpack.c.l.b16 %v122
    %v720 = vunpack.c.h.b16 %v122
    %v721 = vunpack.c.l.b16 %v123
    %v722 = vunpack.c.h.b16 %v123
    %v723 = vunpack.c.l.b16 %v124
    %v724 = vunpack.c.h.b16 %v124
    %v725 = vunpack.c.l.b16 %v125
    %v726 = vunpack.c.h.b16 %v125
    %v727 = vunpack.c.l.b16 %v126
    %v728 = vunpack.c.h.b16 %v126
    %v729 = vunpack.c.l.b16 %v127
    %v730 = vunpack.c.h.b16 %v127
    %v731 = vunpack.c.l.b16 %v128
    %v732 = vunpack.c.h.b16 %v128
    %v733 = vunpack.c.l.b16 %v129
    %v734 = vunpack.c.h.b16 %v129
    %v735 = vunpack.c.l.b16 %v130
    %v736 = vunpack.c.h.b16 %v130
    %v737 = vunpack.c.l.b16 %v131
    %v738 = vunpack.c.h.b16 %v131
    %v739 = vunpack.c.l.b16 %v132
    %v740 = vunpack.c.h.b16 %v132
    %v741 = vunpack.c.l.b16 %v133
    %v742 = vunpack.c.h.b16 %v133
    %v743 = vunpack.c.l.b16 %v134
    %v744 = vunpack.c.h.b16 %v134
    %v745 = vunpack.c.l.b16 %v135
    %v746 = vunpack.c.h.b16 %v135
    %v747 = vunpack.c.l.b16 %v136
    %v748 = vunpack.c.h.b16 %v136
    %v749 = vunpack.c.l.b16 %v137
    %v750 = vunpack.c.h.b16 %v137
    %v751 = vunpack.c.l.b16 %v138
    %v752 = vunpack.c.h.b16 %v138
    %v753 = vunpack.c.l.b16 %v139
    %v754 = vunpack.c.h.b16 %v139
    %v755 = vunpack.c.l.b16 %v140
    %v756 = vunpack.c.h.b16 %v140
    %v757 = vunpack.c.l.b16 %v141
    %v758 = vunpack.c.h.b16 %v141
    %v759 = vunpack.c.l.b16 %v142
    %v760 = vunpack.c.h.b16 %v142
    %v761 = vunpack.c.l.b16 %v143
    %v762 = vunpack.c.h.b16 %v143
    %v763 = vunpack.c.l.b16 %v144
    %v764 = vunpack.c.h.b16 %v144
    %v765 = vunpack.c.l.b16 %v145
    %v766 = vunpack.c.h.b16 %v145
    %v767 = vunpack.c.l.b16 %v146
    %v768 = vunpack.c.h.b16 %v146
    %v769 = vunpack.c.l.b16 %v147
    %v770 = vunpack.c.h.b16 %v147
    %v771 = vunpack.c.l.b16 %v148
    %v772 = vunpack.c.h.b16 %v148
    %v773 = vunpack.c.l.b16 %v149
    %v774 = vunpack.c.h.b16 %v149
    %v775 = vunpack.c.l.b16 %v150
    %v776 = vunpack.c.h.b16 %v150
    %v777 = vunpack.c.l.b16 %v151
    %v778 = vunpack.c.h.b16 %v151
    %v779 = vunpack.c.l.b16 %v152
    %v780 = vunpack.c.h.b16 %v152
    %v781 = vunpack.c.l.b16 %v153
    %v782 = vunpack.c.h.b16 %v153
    %v783 = vunpack.c.l.b16 %v154
    %v784 = vunpack.c.h.b16 %v154
    %v785 = vunpack.c.l.b16 %v155
    %v786 = vunpack.c.h.b16 %v155
    %v787 = vunpack.c.l.b16 %v156
    %v788 = vunpack.c.h.b16 %v156
    %v789 = vunpack.c.l.b16 %v157
    %v790 = vunpack.c.h.b16 %v157
    %v791 = vunpack.c.l.b16 %v158
    %v792 = vunpack.c.h.b16 %v158
    %v793 = vunpack.c.l.b16 %v159
    %v794 = vunpack.c.h.b16 %v159
    %v795 = vunpack.c.l.b16 %v160
    %v796 = vunpack.c.h.b16 %v160
    %v797 = vunpack.c.l.b16 %v161
    %v798 = vunpack.c.h.b16 %v161
    %v799 = vunpack.c.l.b16 %v162
    %v800 = vunpack.c.h.b16 %v162
    %v801 = vunpack.c.l.b16 %v163
    %v802 = vunpack.c.h.b16 %v163
    %v803 = vunpack.c.l.b16 %v164
    %v804 = vunpack.c.h.b16 %v164
    %v805 = vunpack.c.l.b16 %v165
    %v806 = vunpack.c.h.b16 %v165
    %v807 = vunpack.c.l.b16 %v166
    %v808 = vunpack.c.h.b16 %v166
    %v809 = vunpack.c.l.b16 %v167
    %v810 = vunpack.c.h.b16 %v167
    %v811 = vunpack.c.l.b16 %v168
    %v812 = vunpack.c.h.b16 %v168
    %v813 = vunpack.c.l.b16 %v169
    %v814 = vunpack.c.h.b16 %v169
    %v815 = vunpack.c.l.b16 %v170
    %v816 = vunpack.c.h.b16 %v170
    %v817 = vunpack.c.l.b16 %v171
    %v818 = vunpack.c.h.b16 %v171
    %v819 = vunpack.c.l.b16 %v172
    %v820 = vunpack.c.h.b16 %v172
    %v821 = vunpack.c.l.b16 %v173
    %v822 = vunpack.c.h.b16 %v173
    %v823 = vunpack.c.l.b16 %v174
    %v824 = vunpack.c.h.b16 %v174
    %v825 = vunpack.c.l.b16 %v175
    %v826 = vunpack.c.h.b16 %v175
    %v827 = vunpack.c.l.b16 %v176
    %v828 = vunpack.c.h.b16 %v176
    %v829 = vunpack.c.l.b16 %v177
    %v830 = vunpack.c.h.b16 %v177
    %v831 = vunpack.c.l.b16 %v178
    %v832 = vunpack.c.h.b16 %v178
    %v833 = vunpack.c.l.b16 %v179
    %v834 = vunpack.c.h.b16 %v179
    %v835 = vunpack.c.l.b16 %v180
    %v836 = vunpack.c.h.b16 %v180
    %v837 = vunpack.c.l.b16 %v181
    %v838 = vunpack.c.h.b16 %v181
    %v839 = vunpack.c.l.b16 %v182
    %v840 = vunpack.c.h.b16 %v182
    %v841 = vunpack.c.l.b16 %v183
    %v842 = vunpack.c.h.b16 %v183
    %v843 = vunpack.c.l.b16 %v184
    %v844 = vunpack.c.h.b16 %v184
    %v845 = vunpack.c.l.b16 %v185
    %v846 = vunpack.c.h.b16 %v185
    %v847 = vunpack.c.l.b16 %v186
    %v848 = vunpack.c.h.b16 %v186
    %v849 = vunpack.c.l.b16 %v187
    %v850 = vunpack.c.h.b16 %v187
    %v851 = vunpack.c.l.b16 %v188
    %v852 = vunpack.c.h.b16 %v188
    %v853 = vunpack.c.l.b16 %v189
    %v854 = vunpack.c.h.b16 %v189
    %v855 = vunpack.c.l.b16 %v190
    %v856 = vunpack.c.h.b16 %v190
    %v857 = vunpack.c.l.b16 %v191
    %v858 = vunpack.c.h.b16 %v191
    %v859 = vunpack.c.l.b16 %v192
    %v860 = vunpack.c.h.b16 %v192
    %v861 = vunpack.c.l.b16 %v193
    %v862 = vunpack.c.h.b16 %v193
    %v863 = vunpack.c.l.b16 %v194
    %v864 = vunpack.c.h.b16 %v194
    %v865 = vunpack.c.l.b16 %v195
    %v866 = vunpack.c.h.b16 %v195
    %v867 = vunpack.c.l.b16 %v196
    %v868 = vunpack.c.h.b16 %v196
    %v869 = vunpack.c.l.b16 %v197
    %v870 = vunpack.c.h.b16 %v197
    %v871 = vunpack.c.l.b16 %v198
    %v872 = vunpack.c.h.b16 %v198
    %v873 = vunpack.c.l.b16 %v199
    %v874 = vunpack.c.h.b16 %v199
    %v875 = vunpack.c.l.b16 %v200
    %v876 = vunpack.c.h.b16 %v200
    %v877 = vunpack.c.l.b16 %v201
    %v878 = vunpack.c.h.b16 %v201
    %v879 = vunpack.c.l.b16 %v202
    %v880 = vunpack.c.h.b16 %v202
    %v881 = vunpack.c.l.b16 %v203
    %v882 = vunpack.c.h.b16 %v203
    %v883 = vunpack.c.l.b16 %v204
    %v884 = vunpack.c.h.b16 %v204
    %v885 = vunpack.c.l.b16 %v205
    %v886 = vunpack.c.h.b16 %v205
    %v887 = vunpack.c.l.b16 %v206
    %v888 = vunpack.c.h.b16 %v206
    %v889 = vunpack.c.l.b16 %v207
    %v890 = vunpack.c.h.b16 %v207
    %v891 = vunpack.c.l.b16 %v208
    %v892 = vunpack.c.h.b16 %v208
    %v893 = vunpack.c.l.b16 %v209
    %v894 = vunpack.c.h.b16 %v209
    %v895 = vunpack.c.l.b16 %v210
    %v896 = vunpack.c.h.b16 %v210
    %v897 = vunpack.c.l.b16 %v211
    %v898 = vunpack.c.h.b16 %v211
    %v899 = vunpack.c.l.b16 %v212
    %v900 = vunpack.c.h.b16 %v212
    %v901 = vunpack.c.l.b16 %v213
    %v902 = vunpack.c.h.b16 %v213
    %v903 = vunpack.c.l.b16 %v214
    %v904 = vunpack.c.h.b16 %v214
    %v905 = vunpack.c.l.b16 %v215
    %v906 = vunpack.c.h.b16 %v215
    %v907 = vunpack.c.l.b16 %v216
    %v908 = vunpack.c.h.b16 %v216
    %v909 = vunpack.c.l.b16 %v217
    %v910 = vunpack.c.h.b16 %v217
    %v911 = vunpack.c.l.b16 %v218
    %v912 = vunpack.c.h.b16 %v218
    %v913 = vunpack.c.l.b16 %v219
    %v914 = vunpack.c.h.b16 %v219
    %v915 = vunpack.c.l.b16 %v220
    %v916 = vunpack.c.h.b16 %v220
    %v917 = vunpack.c.l.b16 %v221
    %v918 = vunpack.c.h.b16 %v221
    %v919 = vunpack.c.l.b16 %v222
    %v920 = vunpack.c.h.b16 %v222
    %v921 = vunpack.c.l.b16 %v223
    %v922 = vunpack.c.h.b16 %v223
    %v923 = vunpack.c.l.b16 %v224
    %v924 = vunpack.c.h.b16 %v224
    %v925 = vunpack.c.l.b16 %v225
    %v926 = vunpack.c.h.b16 %v225
    %v927 = vunpack.c.l.b16 %v226
    %v928 = vunpack.c.h.b16 %v226
    %v929 = vunpack.c.l.b16 %v227
    %v930 = vunpack.c.h.b16 %v227
    %v931 = vunpack.c.l.b16 %v228
    %v932 = vunpack.c.h.b16 %v228
    %v933 = vunpack.c.l.b16 %v229
    %v934 = vunpack.c.h.b16 %v229
    %v935 = vunpack.c.l.b16 %v230
    %v936 = vunpack.c.h.b16 %v230
    %v937 = vunpack.c.l.b16 %v231
    %v938 = vunpack.c.h.b16 %v231
    %v939 = vunpack.c.l.b16 %v232
    %v940 = vunpack.c.h.b16 %v232
    %v941 = vunpack.c.l.b16 %v233
    %v942 = vunpack.c.h.b16 %v233
    %v943 = vunpack.c.l.b16 %v234
    %v944 = vunpack.c.h.b16 %v234
    %v945 = vunpack.c.l.b16 %v235
    %v946 = vunpack.c.h.b16 %v235
    %v947 = vunpack.c.l.b16 %v236
    %v948 = vunpack.c.h.b16 %v236
    %v949 = vunpack.c.l.b16 %v237
    %v950 = vunpack.c.h.b16 %v237
    %v951 = vunpack.c.l.b16 %v238
    %v952 = vunpack.c.h.b16 %v238
    %v953 = vunpack.c.l.b16 %v239
    %v954 = vunpack.c.h.b16 %v239
    %v955 = vunpack.c.l.b16 %v240
    %v956 = vunpack.c.h.b16 %v240
    %v957 = vunpack.c.l.b16 %v241
    %v958 = vunpack.c.h.b16 %v241
    %v959 = vunpack.c.l.b16 %v242
    %v960 = vunpack.c.h.b16 %v242
    %v961 = vunpack.c.l.b16 %v243
    %v962 = vunpack.c.h.b16 %v243
    %v963 = vunpack.c.l.b16 %v244
    %v964 = vunpack.c.h.b16 %v244
    %v965 = vunpack.c.l.b16 %v245
    %v966 = vunpack.c.h.b16 %v245
    %v967 = vunpack.c.l.b16 %v246
    %v968 = vunpack.c.h.b16 %v246
    %v969 = vunpack.c.l.b16 %v247
    %v970 = vunpack.c.h.b16 %v247
    %v971 = vunpack.c.l.b16 %v248
    %v972 = vunpack.c.h.b16 %v248
    %v973 = vunpack.c.l.b16 %v249
    %v974 = vunpack.c.h.b16 %v249
    %v975 = vunpack.c.l.b16 %v250
    %v976 = vunpack.c.h.b16 %v250
    %v977 = vunpack.c.l.b16 %v251
    %v978 = vunpack.c.h.b16 %v251
    %v979 = vunpack.c.l.b16 %v252
    %v980 = vunpack.c.h.b16 %v252
    %v981 = vunpack.c.l.b16 %v253
    %v982 = vunpack.c.h.b16 %v253
    %v983 = vunpack.c.l.b16 %v254
    %v984 = vunpack.c.h.b16 %v254
    %v985 = vunpack.c.l.b16 %v255
    %v986 = vunpack.c.h.b16 %v255
    %v987 = vunpack.c.l.b16 %v256
    %v988 = vunpack.c.h.b16 %v256
    %v989 = vunpack.c.l.b16 %v257
    %v990 = vunpack.c.h.b16 %v257
    %v991 = vunpack.c.l.b16 %v258
    %v992 = vunpack.c.h.b16 %v258
    %v993 = vunpack.c.l.b16 %v259
    %v994 = vunpack.c.h.b16 %v259
    %v995 = vunpack.c.l.b16 %v260
    %v996 = vunpack.c.h.b16 %v260
    %v997 = vunpack.c.l.b16 %v261
    %v998 = vunpack.c.h.b16 %v261
    %v999 = vunpack.c.l.b16 %v262
    %v1000 = vunpack.c.h.b16 %v262
    %v1001 = vunpack.c.l.b16 %v263
    %v1002 = vunpack.c.h.b16 %v263
    %v1003 = vunpack.c.l.b16 %v264
    %v1004 = vunpack.c.h.b16 %v264
    %v1005 = vunpack.c.l.b16 %v265
    %v1006 = vunpack.c.h.b16 %v265
    %v1007 = vunpack.c.l.b16 %v266
    %v1008 = vunpack.c.h.b16 %v266
    %v1009 = vunpack.c.l.b16 %v267
    %v1010 = vunpack.c.h.b16 %v267
    %v1011 = vunpack.c.l.b16 %v268
    %v1012 = vunpack.c.h.b16 %v268
    %v1013 = vunpack.c.l.b16 %v269
    %v1014 = vunpack.c.h.b16 %v269
    %v1015 = vunpack.c.l.b16 %v270
    %v1016 = vunpack.c.h.b16 %v270
    %v1017 = vunpack.c.l.b16 %v271
    %v1018 = vunpack.c.h.b16 %v271
    %v1019 = vunpack.c.l.b16 %v272
    %v1020 = vunpack.c.h.b16 %v272
    %v1021 = vunpack.c.l.b16 %v273
    %v1022 = vunpack.c.h.b16 %v273
    %v1023 = vunpack.c.l.b16 %v274
    %v1024 = vunpack.c.h.b16 %v274
    %v1025 = vunpack.c.l.b16 %v275
    %v1026 = vunpack.c.h.b16 %v275
    %v1027 = vunpack.c.l.b16 %v276
    %v1028 = vunpack.c.h.b16 %v276
    %v1029 = vunpack.c.l.b16 %v277
    %v1030 = vunpack.c.h.b16 %v277
    %v1031 = vunpack.c.l.b16 %v278
    %v1032 = vunpack.c.h.b16 %v278
    %v1033 = vunpack.c.l.b16 %v279
    %v1034 = vunpack.c.h.b16 %v279
    %v1035 = vunpack.c.l.b16 %v280
    %v1036 = vunpack.c.h.b16 %v280
    %v1037 = vunpack.c.l.b16 %v281
    %v1038 = vunpack.c.h.b16 %v281
    %v1039 = vunpack.c.l.b16 %v282
    %v1040 = vunpack.c.h.b16 %v282
    %v1041 = vunpack.c.l.b16 %v283
    %v1042 = vunpack.c.h.b16 %v283
    %v1043 = vunpack.c.l.b16 %v284
    %v1044 = vunpack.c.h.b16 %v284
    %v1045 = vunpack.c.l.b16 %v285
    %v1046 = vunpack.c.h.b16 %v285
    %v1047 = vunpack.c.l.b16 %v286
    %v1048 = vunpack.c.h.b16 %v286
    %v1049 = vunpack.c.l.b16 %v287
    %v1050 = vunpack.c.h.b16 %v287
    %v1051 = vunpack.c.l.b16 %v288
    %v1052 = vunpack.c.h.b16 %v288
    %v1053 = vunpack.c.l.b16 %v289
    %v1054 = vunpack.c.h.b16 %v289
    %v1055 = vunpack.c.l.b16 %v290
    %v1056 = vunpack.c.h.b16 %v290
    %v1057 = vunpack.c.l.b16 %v291
    %v1058 = vunpack.c.h.b16 %v291
    %v1059 = vunpack.c.l.b16 %v292
    %v1060 = vunpack.c.h.b16 %v292
    %v1061 = vunpack.c.l.b16 %v293
    %v1062 = vunpack.c.h.b16 %v293
    %v1063 = vunpack.c.l.b16 %v294
    %v1064 = vunpack.c.h.b16 %v294
    %v1065 = vunpack.c.l.b16 %v295
    %v1066 = vunpack.c.h.b16 %v295
    %v1067 = vunpack.c.l.b16 %v296
    %v1068 = vunpack.c.h.b16 %v296
    %v1069 = vunpack.c.l.b16 %v297
    %v1070 = vunpack.c.h.b16 %v297
    %v1071 = vunpack.c.l.b16 %v298
    %v1072 = vunpack.c.h.b16 %v298
    %v1073 = vunpack.c.l.b16 %v299
    %v1074 = vunpack.c.h.b16 %v299
    %v1075 = vunpack.c.l.b16 %v300
    %v1076 = vunpack.c.h.b16 %v300
    %v1077 = vunpack.c.l.b16 %v301
    %v1078 = vunpack.c.h.b16 %v301
    %v1079 = vunpack.c.l.b16 %v302
    %v1080 = vunpack.c.h.b16 %v302
    %v1081 = vunpack.c.l.b16 %v303
    %v1082 = vunpack.c.h.b16 %v303
    %v1083 = vunpack.c.l.b16 %v304
    %v1084 = vunpack.c.h.b16 %v304
    %v1085 = vunpack.c.l.b16 %v305
    %v1086 = vunpack.c.h.b16 %v305
    %v1087 = vunpack.c.l.b16 %v306
    %v1088 = vunpack.c.h.b16 %v306
    %v1089 = vunpack.c.l.b16 %v307
    %v1090 = vunpack.c.h.b16 %v307
    %v1091 = vunpack.c.l.b16 %v308
    %v1092 = vunpack.c.h.b16 %v308
    %v1093 = vunpack.c.l.b16 %v309
    %v1094 = vunpack.c.h.b16 %v309
    %v1095 = vunpack.c.l.b16 %v310
    %v1096 = vunpack.c.h.b16 %v310
    %v1097 = vunpack.c.l.b16 %v311
    %v1098 = vunpack.c.h.b16 %v311
    %v1099 = vunpack.c.l.b16 %v312
    %v1100 = vunpack.c.h.b16 %v312
    %v1101 = vunpack.c.l.b16 %v313
    %v1102 = vunpack.c.h.b16 %v313
    %v1103 = vunpack.c.l.b16 %v314
    %v1104 = vunpack.c.h.b16 %v314
    %v1105 = vunpack.c.l.b16 %v315
    %v1106 = vunpack.c.h.b16 %v315
    %v1107 = vunpack.c.l.b16 %v316
    %v1108 = vunpack.c.h.b16 %v316
    %v1109 = vunpack.c.l.b16 %v317
    %v1110 = vunpack.c.h.b16 %v317
    %v1111 = vunpack.c.l.b16 %v318
    %v1112 = vunpack.c.h.b16 %v318
    %v1113 = vunpack.c.l.b16 %v319
    %v1114 = vunpack.c.h.b16 %v319
    %v1115 = vunpack.c.l.b16 %v320
    %v1116 = vunpack.c.h.b16 %v320
    %v1117 = vunpack.c.l.b16 %v321
    %v1118 = vunpack.c.h.b16 %v321
    %v1119 = vunpack.c.l.b16 %v322
    %v1120 = vunpack.c.h.b16 %v322
    %v1121 = vunpack.c.l.b16 %v323
    %v1122 = vunpack.c.h.b16 %v323
    %v1123 = vunpack.c.l.b16 %v324
    %v1124 = vunpack.c.h.b16 %v324
    %v1125 = vunpack.c.l.b16 %v325
    %v1126 = vunpack.c.h.b16 %v325
    %v1127 = vunpack.c.l.b16 %v326
    %v1128 = vunpack.c.h.b16 %v326
    %v1129 = vunpack.c.l.b16 %v327
    %v1130 = vunpack.c.h.b16 %v327
    %v1131 = vunpack.c.l.b16 %v328
    %v1132 = vunpack.c.h.b16 %v328
    %v1133 = vunpack.c.l.b16 %v329
    %v1134 = vunpack.c.h.b16 %v329
    %v1135 = vunpack.c.l.b16 %v330
    %v1136 = vunpack.c.h.b16 %v330
    %v1137 = vunpack.c.l.b16 %v331
    %v1138 = vunpack.c.h.b16 %v331
    %v1139 = vunpack.c.l.b16 %v332
    %v1140 = vunpack.c.h.b16 %v332
    %v1141 = vunpack.c.l.b16 %v333
    %v1142 = vunpack.c.h.b16 %v333
    %v1143 = vunpack.c.l.b16 %v334
    %v1144 = vunpack.c.h.b16 %v334
    %v1145 = vunpack.c.l.b16 %v335
    %v1146 = vunpack.c.h.b16 %v335
    %v1147 = vunpack.c.l.b16 %v336
    %v1148 = vunpack.c.h.b16 %v336
    %v1149 = vunpack.c.l.b16 %v337
    %v1150 = vunpack.c.h.b16 %v337
    %v1151 = vunpack.c.l.b16 %v338
    %v1152 = vunpack.c.h.b16 %v338
    %v1153 = vunpack.c.l.b16 %v339
    %v1154 = vunpack.c.h.b16 %v339
    %v1155 = vunpack.c.l.b16 %v340
    %v1156 = vunpack.c.h.b16 %v340
    %v1157 = vunpack.c.l.b16 %v341
    %v1158 = vunpack.c.h.b16 %v341
    %v1159 = vunpack.c.l.b16 %v342
    %v1160 = vunpack.c.h.b16 %v342
    %v1161 = vunpack.c.l.b16 %v343
    %v1162 = vunpack.c.h.b16 %v343
    %v1163 = vunpack.c.l.b16 %v344
    %v1164 = vunpack.c.h.b16 %v344
    %v1165 = vunpack.c.l.b16 %v345
    %v1166 = vunpack.c.h.b16 %v345
    %v1167 = vunpack.c.l.b16 %v346
    %v1168 = vunpack.c.h.b16 %v346
    %v1169 = vunpack.c.l.b16 %v347
    %v1170 = vunpack.c.h.b16 %v347
    %v1171 = vunpack.c.l.b16 %v348
    %v1172 = vunpack.c.h.b16 %v348
    %v1173 = vunpack.c.l.b16 %v349
    %v1174 = vunpack.c.h.b16 %v349
    %v1175 = vunpack.c.l.b16 %v350
    %v1176 = vunpack.c.h.b16 %v350
    %v1177 = vunpack.c.l.b16 %v351
    %v1178 = vunpack.c.h.b16 %v351
    %v1179 = vunpack.c.l.b16 %v352
    %v1180 = vunpack.c.h.b16 %v352
    %v1181 = vunpack.c.l.b16 %v353
    %v1182 = vunpack.c.h.b16 %v353
    %v1183 = vunpack.c.l.b16 %v354
    %v1184 = vunpack.c.h.b16 %v354
    %v1185 = vunpack.c.l.b16 %v355
    %v1186 = vunpack.c.h.b16 %v355
    %v1187 = vunpack.c.l.b16 %v356
    %v1188 = vunpack.c.h.b16 %v356
    %v1189 = vunpack.c.l.b16 %v357
    %v1190 = vunpack.c.h.b16 %v357
    %v1191 = vunpack.c.l.b16 %v358
    %v1192 = vunpack.c.h.b16 %v358
    %v1193 = vunpack.c.l.b16 %v359
    %v1194 = vunpack.c.h.b16 %v359
    %v1195 = vunpack.c.l.b16 %v360
    %v1196 = vunpack.c.h.b16 %v360
    %v1197 = vunpack.c.l.b16 %v361
    %v1198 = vunpack.c.h.b16 %v361
    %v1199 = vunpack.c.l.b16 %v362
    %v1200 = vunpack.c.h.b16 %v362
    %v1201 = vunpack.c.l.b16 %v363
    %v1202 = vunpack.c.h.b16 %v363
    %v1203 = vunpack.c.l.b16 %v364
    %v1204 = vunpack.c.h.b16 %v364
    %v1205 = vunpack.c.l.b16 %v365
    %v1206 = vunpack.c.h.b16 %v365
    %v1207 = vunpack.c.l.b16 %v366
    %v1208 = vunpack.c.h.b16 %v366
    %v1209 = vunpack.c.l.b16 %v367
    %v1210 = vunpack.c.h.b16 %v367
    %v1211 = vunpack.c.l.b16 %v368
    %v1212 = vunpack.c.h.b16 %v368
    %v1213 = vunpack.c.l.b16 %v369
    %v1214 = vunpack.c.h.b16 %v369
    %v1215 = vunpack.c.l.b16 %v370
    %v1216 = vunpack.c.h.b16 %v370
    %v1217 = vunpack.c.l.b16 %v371
    %v1218 = vunpack.c.h.b16 %v371
    %v1219 = vunpack.c.l.b16 %v372
    %v1220 = vunpack.c.h.b16 %v372
    %v1221 = vunpack.c.l.b16 %v373
    %v1222 = vunpack.c.h.b16 %v373
    %v1223 = vunpack.c.l.b16 %v374
    %v1224 = vunpack.c.h.b16 %v374
    %v1225 = vunpack.c.l.b16 %v375
    %v1226 = vunpack.c.h.b16 %v375
    %v1227 = vunpack.c.l.b16 %v376
    %v1228 = vunpack.c.h.b16 %v376
    %v1229 = vunpack.c.l.b16 %v377
    %v1230 = vunpack.c.h.b16 %v377
    %v1231 = vunpack.c.l.b16 %v378
    %v1232 = vunpack.c.h.b16 %v378
    %v1233 = vunpack.c.l.b16 %v379
    %v1234 = vunpack.c.h.b16 %v379
    %v1235 = vunpack.c.l.b16 %v380
    %v1236 = vunpack.c.h.b16 %v380
    %v1237 = vunpack.c.l.b16 %v381
    %v1238 = vunpack.c.h.b16 %v381
    %v1239 = vunpack.c.l.b16 %v382
    %v1240 = vunpack.c.h.b16 %v382
    %v1241 = vunpack.c.l.b16 %v383
    %v1242 = vunpack.c.h.b16 %v383
    %v1243 = vunpack.c.l.b16 %v384
    %v1244 = vunpack.c.h.b16 %v384
    %v1245 = vunpack.c.l.b16 %v385
    %v1246 = vunpack.c.h.b16 %v385
    %v1247 = vunpack.c.l.b16 %v386
    %v1248 = vunpack.c.h.b16 %v386
    %v1249 = vunpack.c.l.b16 %v387
    %v1250 = vunpack.c.h.b16 %v387
    %v1251 = vunpack.c.l.b16 %v388
    %v1252 = vunpack.c.h.b16 %v388
    %v1253 = vpack.c.b16 %v683, %v677
    %v1254 = vpack.c.b16 %v684, %v678
    %v1255 = vpack.c.b16 %v685, %v679
    %v1256 = vpack.c.b16 %v686, %v680
    %v1257 = vpack.c.b16 %v687, %v681
    %v1258 = vpack.c.b16 %v688, %v682
    %v1259 = vpack.c.b16 %v695, %v689
    %v1260 = vpack.c.b16 %v696, %v690
    %v1261 = vpack.c.b16 %v697, %v691
    %v1262 = vpack.c.b16 %v698, %v692
    %v1263 = vpack.c.b16 %v699, %v693
    %v1264 = vpack.c.b16 %v700, %v694
    %v1265 = vpack.c.b16 %v707, %v701
    %v1266 = vpack.c.b16 %v708, %v702
    %v1267 = vpack.c.b16 %v709, %v703
    %v1268 = vpack.c.b16 %v710, %v704
    %v1269 = vpack.c.b16 %v711, %v705
    %v1270 = vpack.c.b16 %v712, %v706
    %v1271 = vpack.c.b16 %v719, %v713
    %v1272 = vpack.c.b16 %v720, %v714
    %v1273 = vpack.c.b16 %v721, %v715
    %v1274 = vpack.c.b16 %v722, %v716
    %v1275 = vpack.c.b16 %v723, %v717
    %v1276 = vpack.c.b16 %v724, %v718
    %v1277 = vpack.c.b16 %v731, %v725
    %v1278 = vpack.c.b16 %v732, %v726
    %v1279 = vpack.c.b16 %v733, %v727
    %v1280 = vpack.c.b16 %v734, %v728
    %v1281 = vpack.c.b16 %v735, %v729
    %v1282 = vpack.c.b16 %v736, %v730
    %v1283 = vpack.c.b16 %v743, %v737
    %v1284 = vpack.c.b16 %v744, %v738
    %v1285 = vpack.c.b16 %v745, %v739
    %v1286 = vpack.c.b16 %v746, %v740
    %v1287 = vpack.c.b16 %v747, %v741
    %v1288 = vpack.c.b16 %v748, %v742
    %v1289 = vpack.c.b16 %v755, %v749
    %v1290 = vpack.c.b16 %v756, %v750
    %v1291 = vpack.c.b16 %v757, %v751
    %v1292 = vpack.c.b16 %v758, %v752
    %v1293 = vpack.c.b16 %v759, %v753
    %v1294 = vpack.c.b16 %v760, %v754
    %v1295 = vpack.c.b16 %v767, %v761
    %v1296 = vpack.c.b16 %v768, %v762
    %v1297 = vpack.c.b16 %v769, %v763
    %v1298 = vpack.c.b16 %v770, %v764
    %v1299 = vpack.c.b16 %v771, %v765
    %v1300 = vpack.c.b16 %v772, %v766
    %v1301 = vpack.c.b16 %v779, %v773
    %v1302 = vpack.c.b16 %v780, %v774
    %v1303 = vpack.c.b16 %v781, %v775
    %v1304 = vpack.c.b16 %v782, %v776
    %v1305 = vpack.c.b16 %v783, %v777
    %v1306 = vpack.c.b16 %v784, %v778
    %v1307 = vpack.c.b16 %v791, %v785
    %v1308 = vpack.c.b16 %v792, %v786
    %v1309 = vpack.c.b16 %v793, %v787
    %v1310 = vpack.c.b16 %v794, %v788
    %v1311 = vpack.c.b16 %v795, %v789
    %v1312 = vpack.c.b16 %v796, %v790
    %v1313 = vpack.c.b16 %v803, %v797
    %v1314 = vpack.c.b16 %v804, %v798
    %v1315 = vpack.c.b16 %v805, %v799
    %v1316 = vpack.c.b16 %v806, %v800
    %v1317 = vpack.c.b16 %v807, %v801
    %v1318 = vpack.c.b16 %v808, %v802
    %v1319 = vpack.c.b16 %v815, %v809
    %v1320 = vpack.c.b16 %v816, %v810
    %v1321 = vpack.c.b16 %v817, %v811
    %v1322 = vpack.c.b16 %v818, %v812
    %v1323 = vpack.c.b16 %v819, %v813
    %v1324 = vpack.c.b16 %v820, %v814
    %v1325 = vpack.c.b16 %v827, %v821
    %v1326 = vpack.c.b16 %v828, %v822
    %v1327 = vpack.c.b16 %v829, %v823
    %v1328 = vpack.c.b16 %v830, %v824
    %v1329 = vpack.c.b16 %v831, %v825
    %v1330 = vpack.c.b16 %v832, %v826
    %v1331 = vpack.c.b16 %v839, %v833
    %v1332 = vpack.c.b16 %v840, %v834
    %v1333 = vpack.c.b16 %v841, %v835
    %v1334 = vpack.c.b16 %v842, %v836
    %v1335 = vpack.c.b16 %v843, %v837
    %v1336 = vpack.c.b16 %v844, %v838
    %v1337 = vpack.c.b16 %v851, %v845
    %v1338 = vpack.c.b16 %v852, %v846
    %v1339 = vpack.c.b16 %v853, %v847
    %v1340 = vpack.c.b16 %v854, %v848
    %v1341 = vpack.c.b16 %v855, %v849
    %v1342 = vpack.c.b16 %v856, %v850
    %v1343 = vpack.c.b16 %v863, %v857
    %v1344 = vpack.c.b16 %v864, %v858
    %v1345 = vpack.c.b16 %v865, %v859
    %v1346 = vpack.c.b16 %v866, %v860
    %v1347 = vpack.c.b16 %v867, %v861
    %v1348 = vpack.c.b16 %v868, %v862
    %v1349 = vpack.c.b16 %v875, %v869
    %v1350 = vpack.c.b16 %v876, %v870
    %v1351 = vpack.c.b16 %v877, %v871
    %v1352 = vpack.c.b16 %v878, %v872
    %v1353 = vpack.c.b16 %v879, %v873
    %v1354 = vpack.c.b16 %v880, %v874
    %v1355 = vpack.c.b16 %v887, %v881
    %v1356 = vpack.c.b16 %v888, %v882
    %v1357 = vpack.c.b16 %v889, %v883
    %v1358 = vpack.c.b16 %v890, %v884
    %v1359 = vpack.c.b16 %v891, %v885
    %v1360 = vpack.c.b16 %v892, %v886
    %v1361 = vpack.c.b16 %v899, %v893
    %v1362 = vpack.c.b16 %v900, %v894
    %v1363 = vpack.c.b16 %v901, %v895
    %v1364 = vpack.c.b16 %v902, %v896
    %v1365 = vpack.c.b16 %v903, %v897
    %v1366 = vpack.c.b16 %v904, %v898
    %v1367 = vpack.c.b16 %v911, %v905
    %v1368 = vpack.c.b16 %v912, %v906
    %v1369 = vpack.c.b16 %v913, %v907
    %v1370 = vpack.c.b16 %v914, %v908
    %v1371 = vpack.c.b16 %v915, %v909
    %v1372 = vpack.c.b16 %v916, %v910
    %v1373 = vpack.c.b16 %v923, %v917
    %v1374 = vpack.c.b16 %v924, %v918
    %v1375 = vpack.c.b16 %v925, %v919
    %v1376 = vpack.c.b16 %v926, %v920
    %v1377 = vpack.c.b16 %v927, %v921
    %v1378 = vpack.c.b16 %v928, %v922
    %v1379 = vpack.c.b16 %v935, %v929
    %v1380 = vpack.c.b16 %v936, %v930
    %v1381 = vpack.c.b16 %v937, %v931
    %v1382 = vpack.c.b16 %v938, %v932
    %v1383 = vpack.c.b16 %v939, %v933
    %v1384 = vpack.c.b16 %v940, %v934
    %v1385 = vpack.c.b16 %v947, %v941
    %v1386 = vpack.c.b16 %v948, %v942
    %v1387 = vpack.c.b16 %v949, %v943
    %v1388 = vpack.c.b16 %v950, %v944
    %v1389 = vpack.c.b16 %v951, %v945
    %v1390 = vpack.c.b16 %v952, %v946
    %v1391 = vpack.c.b16 %v959, %v953
    %v1392 = vpack.c.b16 %v960, %v954
    %v1393 = vpack.c.b16 %v961, %v955
    %v1394 = vpack.c.b16 %v962, %v956
    %v1395 = vpack.c.b16 %v963, %v957
    %v1396 = vpack.c.b16 %v964, %v958
    %v1397 = vpack.c.b16 %v971, %v965
    %v1398 = vpack.c.b16 %v972, %v966
    %v1399 = vpack.c.b16 %v973, %v967
    %v1400 = vpack.c.b16 %v974, %v968
    %v1401 = vpack.c.b16 %v975, %v969
    %v1402 = vpack.c.b16 %v976, %v970
    %v1403 = vpack.c.b16 %v983, %v977
    %v1404 = vpack.c.b16 %v984, %v978
    %v1405 = vpack.c.b16 %v985, %v979
    %v1406 = vpack.c.b16 %v986, %v980
    %v1407 = vpack.c.b16 %v987, %v981
    %v1408 = vpack.c.b16 %v988, %v982
    %v1409 = vpack.c.b16 %v995, %v989
    %v1410 = vpack.c.b16 %v996, %v990
    %v1411 = vpack.c.b16 %v997, %v991
    %v1412 = vpack.c.b16 %v998, %v992
    %v1413 = vpack.c.b16 %v999, %v993
    %v1414 = vpack.c.b16 %v1000, %v994
    %v1415 = vpack.c.b16 %v1007, %v1001
    %v1416 = vpack.c.b16 %v1008, %v1002
    %v1417 = vpack.c.b16 %v1009, %v1003
    %v1418 = vpack.c.b16 %v1010, %v1004
    %v1419 = vpack.c.b16 %v1011, %v1005
    %v1420 = vpack.c.b16 %v1012, %v1006
    %v1421 = vpack.c.b16 %v1019, %v1013
    %v1422 = vpack.c.b16 %v1020, %v1014
    %v1423 = vpack.c.b16 %v1021, %v1015
    %v1424 = vpack.c.b16 %v1022, %v1016
    %v1425 = vpack.c.b16 %v1023, %v1017
    %v1426 = vpack.c.b16 %v1024, %v1018
    %v1427 = vpack.c.b16 %v1031, %v1025
    %v1428 = vpack.c.b16 %v1032, %v1026
    %v1429 = vpack.c.b16 %v1033, %v1027
    %v1430 = vpack.c.b16 %v1034, %v1028
    %v1431 = vpack.c.b16 %v1035, %v1029
    %v1432 = vpack.c.b16 %v1036, %v1030
    %v1433 = vpack.c.b16 %v1043, %v1037
    %v1434 = vpack.c.b16 %v1044, %v1038
    %v1435 = vpack.c.b16 %v1045, %v1039
    %v1436 = vpack.c.b16 %v1046, %v1040
    %v1437 = vpack.c.b16 %v1047, %v1041
    %v1438 = vpack.c.b16 %v1048, %v1042
    %v1439 = vpack.c.b16 %v1055, %v1049
    %v1440 = vpack.c.b16 %v1056, %v1050
    %v1441 = vpack.c.b16 %v1057, %v1051
    %v1442 = vpack.c.b16 %v1058, %v1052
    %v1443 = vpack.c.b16 %v1059, %v1053
    %v1444 = vpack.c.b16 %v1060, %v1054
    %v1445 = vpack.c.b16 %v1067, %v1061
    %v1446 = vpack.c.b16 %v1068, %v1062
    %v1447 = vpack.c.b16 %v1069, %v1063
    %v1448 = vpack.c.b16 %v1070, %v1064
    %v1449 = vpack.c.b16 %v1071, %v1065
    %v1450 = vpack.c.b16 %v1072, %v1066
    %v1451 = vpack.c.b16 %v1079, %v1073
    %v1452 = vpack.c.b16 %v1080, %v1074
    %v1453 = vpack.c.b16 %v1081, %v1075
    %v1454 = vpack.c.b16 %v1082, %v1076
    %v1455 = vpack.c.b16 %v1083, %v1077
    %v1456 = vpack.c.b16 %v1084, %v1078
    %v1457 = vpack.c.b16 %v1091, %v1085
    %v1458 = vpack.c.b16 %v1092, %v1086
    %v1459 = vpack.c.b16 %v1093, %v1087
    %v1460 = vpack.c.b16 %v1094, %v1088
    %v1461 = vpack.c.b16 %v1095, %v1089
    %v1462 = vpack.c.b16 %v1096, %v1090
    %v1463 = vpack.c.b16 %v1103, %v1097
    %v1464 = vpack.c.b16 %v1104, %v1098
    %v1465 = vpack.c.b16 %v1105, %v1099
    %v1466 = vpack.c.b16 %v1106, %v1100
    %v1467 = vpack.c.b16 %v1107, %v1101
    %v1468 = vpack.c.b16 %v1108, %v1102
    %v1469 = vpack.c.b16 %v1115, %v1109
    %v1470 = vpack.c.b16 %v1116, %v1110
    %v1471 = vpack.c.b16 %v1117, %v1111
    %v1472 = vpack.c.b16 %v1118, %v1112
    %v1473 = vpack.c.b16 %v1119, %v1113
    %v1474 = vpack.c.b16 %v1120, %v1114
    %v1475 = vpack.c.b16 %v1127, %v1121
    %v1476 = vpack.c.b16 %v1128, %v1122
    %v1477 = vpack.c.b16 %v1129, %v1123
    %v1478 = vpack.c.b16 %v1130, %v1124
    %v1479 = vpack.c.b16 %v1131, %v1125
    %v1480 = vpack.c.b16 %v1132, %v1126
    %v1481 = vpack.c.b16 %v1139, %v1133
    %v1482 = vpack.c.b16 %v1140, %v1134
    %v1483 = vpack.c.b16 %v1141, %v1135
    %v1484 = vpack.c.b16 %v1142, %v1136
    %v1485 = vpack.c.b16 %v1143, %v1137
    %v1486 = vpack.c.b16 %v1144, %v1138
    %v1487 = vpack.c.b16 %v1151, %v1145
    %v1488 = vpack.c.b16 %v1152, %v1146
    %v1489 = vpack.c.b16 %v1153, %v1147
    %v1490 = vpack.c.b16 %v1154, %v1148
    %v1491 = vpack.c.b16 %v1155, %v1149
    %v1492 = vpack.c.b16 %v1156, %v1150
    %v1493 = vpack.c.b16 %v1163, %v1157
    %v1494 = vpack.c.b16 %v1164, %v1158
    %v1495 = vpack.c.b16 %v1165, %v1159
    %v1496 = vpack.c.b16 %v1166, %v1160
    %v1497 = vpack.c.b16 %v1167, %v1161
    %v1498 = vpack.c.b16 %v1168, %v1162
    %v1499 = vpack.c.b16 %v1175, %v1169
    %v1500 = vpack.c.b16 %v1176, %v1170
    %v1501 = vpack.c.b16 %v1177, %v1171
    %v1502 = vpack.c.b16 %v1178, %v1172
    %v1503 = vpack.c.b16 %v1179, %v1173
    %v1504 = vpack.c.b16 %v1180, %v1174
    %v1505 = vpack.c.b16 %v1187, %v1181
    %v1506 = vpack.c.b16 %v1188, %v1182
    %v1507 = vpack.c.b16 %v1189, %v1183
    %v1508 = vpack.c.b16 %v1190, %v1184
    %v1509 = vpack.c.b16 %v1191, %v1185
    %v1510 = vpack.c.b16 %v1192, %v1186
    %v1511 = vpack.c.b16 %v1199, %v1193
    %v1512 = vpack.c.b16 %v1200, %v1194
    %v1513 = vpack.c.b16 %v1201, %v1195
    %v1514 = vpack.c.b16 %v1202, %v1196
    %v1515 = vpack.c.b16 %v1203, %v1197
    %v1516 = vpack.c.b16 %v1204, %v1198
    %v1517 = vpack.c.b16 %v1211, %v1205
    %v1518 = vpack.c.b16 %v1212, %v1206
    %v1519 = vpack.c.b16 %v1213, %v1207
    %v1520 = vpack.c.b16 %v1214, %v1208
    %v1521 = vpack.c.b16 %v1215, %v1209
    %v1522 = vpack.c.b16 %v1216, %v1210
    %v1523 = vpack.c.b16 %v1223, %v1217
    %v1524 = vpack.c.b16 %v1224, %v1218
    %v1525 = vpack.c.b16 %v1225, %v1219
    %v1526 = vpack.c.b16 %v1226, %v1220
    %v1527 = vpack.c.b16 %v1227, %v1221
    %v1528 = vpack.c.b16 %v1228, %v1222
    %v1529 = vpack.c.b16 %v1235, %v1229
    %v1530 = vpack.c.b16 %v1236, %v1230
    %v1531 = vpack.c.b16 %v1237, %v1231
    %v1532 = vpack.c.b16 %v1238, %v1232
    %v1533 = vpack.c.b16 %v1239, %v1233
    %v1534 = vpack.c.b16 %v1240, %v1234
    %v1535 = vpack.c.b16 %v1247, %v1241
    %v1536 = vpack.c.b16 %v1248, %v1242
    %v1537 = vpack.c.b16 %v1249, %v1243
    %v1538 = vpack.c.b16 %v1250, %v1244
    %v1539 = vpack.c.b16 %v1251, %v1245
    %v1540 = vpack.c.b16 %v1252, %v1246
    %1829 = vmatpush.bf16.msra.mxu0 %v1295
    %1830 = vmatpush.bf16.msra.mxu0 %v1289
    %1831 = vmatpush.bf16.msra.mxu0 %v1283
    %1832 = vmatpush.bf16.msra.mxu0 %v1277
    %1833 = vmatpush.bf16.msra.mxu0 %v1271
    %1834 = vmatpush.bf16.msra.mxu0 %v1265
    %1835 = vmatpush.bf16.msra.mxu0 %v1259
    %1836 = vmatpush.bf16.msra.mxu0 %v1253
    %1837 = vmatmul.bf16.gmra.mxu0 %v95
    %v1838 = vpop.f32.mrf.mxu0
    %v1839 = vadd.f32 0.0, %v1838
    %v1840 = vpop.f32.mrf.mxu0
    %v1841 = vadd.f32 0.0, %v1840
    %1842 = vdwg.mxu0
    %1843 = vmatpush.bf16.msra.mxu0 %v1343
    %1844 = vmatpush.bf16.msra.mxu0 %v1337
    %1845 = vmatpush.bf16.msra.mxu0 %v1331
    %1846 = vmatpush.bf16.msra.mxu0 %v1325
    %1847 = vmatpush.bf16.msra.mxu0 %v1319
    %1848 = vmatpush.bf16.msra.mxu0 %v1313
    %1849 = vmatpush.bf16.msra.mxu0 %v1307
    %1850 = vmatpush.bf16.msra.mxu0 %v1301
    %1851 = vmatmul.bf16.gmra.mxu0 %v96
    %v1852 = vpop.f32.mrf.mxu0
    %v1853 = vadd.f32 %v1839, %v1852
    %v1854 = vpop.f32.mrf.mxu0
    %v1855 = vadd.f32 %v1841, %v1854
    %1856 = vdwg.mxu0
    %1857 = vmatpush.bf16.msra.mxu0 %v1391
    %1858 = vmatpush.bf16.msra.mxu0 %v1385
    %1859 = vmatpush.bf16.msra.mxu0 %v1379
    %1860 = vmatpush.bf16.msra.mxu0 %v1373
    %1861 = vmatpush.bf16.msra.mxu0 %v1367
    %1862 = vmatpush.bf16.msra.mxu0 %v1361
    %1863 = vmatpush.bf16.msra.mxu0 %v1355
    %1864 = vmatpush.bf16.msra.mxu0 %v1349
    %1865 = vmatmul.bf16.gmra.mxu0 %v97
    %v1866 = vpop.f32.mrf.mxu0
    %v1867 = vadd.f32 %v1853, %v1866
    %v1868 = vpop.f32.mrf.mxu0
    %v1869 = vadd.f32 %v1855, %v1868
    %1870 = vdwg.mxu0
    %1871 = vmatpush.bf16.msra.mxu0 %v1439
    %1872 = vmatpush.bf16.msra.mxu0 %v1433
    %1873 = vmatpush.bf16.msra.mxu0 %v1427
    %1874 = vmatpush.bf16.msra.mxu0 %v1421
    %1875 = vmatpush.bf16.msra.mxu0 %v1415
    %1876 = vmatpush.bf16.msra.mxu0 %v1409
    %1877 = vmatpush.bf16.msra.mxu0 %v1403
    %1878 = vmatpush.bf16.msra.mxu0 %v1397
    %1879 = vmatmul.bf16.gmra.mxu0 %v98
    %v1880 = vpop.f32.mrf.mxu0
    %v1881 = vadd.f32 %v1867, %v1880
    %v1882 = vpop.f32.mrf.mxu0
    %v1883 = vadd.f32 %v1869, %v1882
    %1884 = vdwg.mxu0
    %1885 = vmatpush.bf16.msra.mxu0 %v1487
    %1886 = vmatpush.bf16.msra.mxu0 %v1481
    %1887 = vmatpush.bf16.msra.mxu0 %v1475
    %1888 = vmatpush.bf16.msra.mxu0 %v1469
    %1889 = vmatpush.bf16.msra.mxu0 %v1463
    %1890 = vmatpush.bf16.msra.mxu0 %v1457
    %1891 = vmatpush.bf16.msra.mxu0 %v1451
    %1892 = vmatpush.bf16.msra.mxu0 %v1445
    %1893 = vmatmul.bf16.gmra.mxu0 %v99
    %v1894 = vpop.f32.mrf.mxu0
    %v1895 = vadd.f32 %v1881, %v1894
    %v1896 = vpop.f32.mrf.mxu0
    %v1897 = vadd.f32 %v1883, %v1896
    %1898 = vdwg.mxu0
    %1899 = vmatpush.bf16.msra.mxu0 %v1535
    %1900 = vmatpush.bf16.msra.mxu0 %v1529
    %1901 = vmatpush.bf16.msra.mxu0 %v1523
    %1902 = vmatpush.bf16.msra.mxu0 %v1517
    %1903 = vmatpush.bf16.msra.mxu0 %v1511
    %1904 = vmatpush.bf16.msra.mxu0 %v1505
    %1905 = vmatpush.bf16.msra.mxu0 %v1499
    %1906 = vmatpush.bf16.msra.mxu0 %v1493
    %1907 = vmatmul.bf16.gmra.mxu0 %v100
    %v1908 = vpop.f32.mrf.mxu0
    %v1909 = vadd.f32 %v1895, %v1908
    %v1910 = vpop.f32.mrf.mxu0
    %v1911 = vadd.f32 %v1897, %v1910
    %1912 = vdwg.mxu0
    %1913 = vmatpush.bf16.msra.mxu0 %v1296
    %1914 = vmatpush.bf16.msra.mxu0 %v1290
    %1915 = vmatpush.bf16.msra.mxu0 %v1284
    %1916 = vmatpush.bf16.msra.mxu0 %v1278
    %1917 = vmatpush.bf16.msra.mxu0 %v1272
    %1918 = vmatpush.bf16.msra.mxu0 %v1266
    %1919 = vmatpush.bf16.msra.mxu0 %v1260
    %1920 = vmatpush.bf16.msra.mxu0 %v1254
    %1921 = vmatmul.bf16.gmra.mxu0 %v95
    %v1922 = vpop.f32.mrf.mxu0
    %v1923 = vadd.f32 0.0, %v1922
    %v1924 = vpop.f32.mrf.mxu0
    %v1925 = vadd.f32 0.0, %v1924
    %1926 = vdwg.mxu0
    %1927 = vmatpush.bf16.msra.mxu0 %v1344
    %1928 = vmatpush.bf16.msra.mxu0 %v1338
    %1929 = vmatpush.bf16.msra.mxu0 %v1332
    %1930 = vmatpush.bf16.msra.mxu0 %v1326
    %1931 = vmatpush.bf16.msra.mxu0 %v1320
    %1932 = vmatpush.bf16.msra.mxu0 %v1314
    %1933 = vmatpush.bf16.msra.mxu0 %v1308
    %1934 = vmatpush.bf16.msra.mxu0 %v1302
    %1935 = vmatmul.bf16.gmra.mxu0 %v96
    %v1936 = vpop.f32.mrf.mxu0
    %v1937 = vadd.f32 %v1923, %v1936
    %v1938 = vpop.f32.mrf.mxu0
    %v1939 = vadd.f32 %v1925, %v1938
    %1940 = vdwg.mxu0
    %1941 = vmatpush.bf16.msra.mxu0 %v1392
    %1942 = vmatpush.bf16.msra.mxu0 %v1386
    %1943 = vmatpush.bf16.msra.mxu0 %v1380
    %1944 = vmatpush.bf16.msra.mxu0 %v1374
    %1945 = vmatpush.bf16.msra.mxu0 %v1368
    %1946 = vmatpush.bf16.msra.mxu0 %v1362
    %1947 = vmatpush.bf16.msra.mxu0 %v1356
    %1948 = vmatpush.bf16.msra.mxu0 %v1350
    %1949 = vmatmul.bf16.gmra.mxu0 %v97
    %v1950 = vpop.f32.mrf.mxu0
    %v1951 = vadd.f32 %v1937, %v1950
    %v1952 = vpop.f32.mrf.mxu0
    %v1953 = vadd.f32 %v1939, %v1952
    %1954 = vdwg.mxu0
    %1955 = vmatpush.bf16.msra.mxu0 %v1440
    %1956 = vmatpush.bf16.msra.mxu0 %v1434
    %1957 = vmatpush.bf16.msra.mxu0 %v1428
    %1958 = vmatpush.bf16.msra.mxu0 %v1422
    %1959 = vmatpush.bf16.msra.mxu0 %v1416
    %1960 = vmatpush.bf16.msra.mxu0 %v1410
    %1961 = vmatpush.bf16.msra.mxu0 %v1404
    %1962 = vmatpush.bf16.msra.mxu0 %v1398
    %1963 = vmatmul.bf16.gmra.mxu0 %v98
    %v1964 = vpop.f32.mrf.mxu0
    %v1965 = vadd.f32 %v1951, %v1964
    %v1966 = vpop.f32.mrf.mxu0
    %v1967 = vadd.f32 %v1953, %v1966
    %1968 = vdwg.mxu0
    %1969 = vmatpush.bf16.msra.mxu0 %v1488
    %1970 = vmatpush.bf16.msra.mxu0 %v1482
    %1971 = vmatpush.bf16.msra.mxu0 %v1476
    %1972 = vmatpush.bf16.msra.mxu0 %v1470
    %1973 = vmatpush.bf16.msra.mxu0 %v1464
    %1974 = vmatpush.bf16.msra.mxu0 %v1458
    %1975 = vmatpush.bf16.msra.mxu0 %v1452
    %1976 = vmatpush.bf16.msra.mxu0 %v1446
    %1977 = vmatmul.bf16.gmra.mxu0 %v99
    %v1978 = vpop.f32.mrf.mxu0
    %v1979 = vadd.f32 %v1965, %v1978
    %v1980 = vpop.f32.mrf.mxu0
    %v1981 = vadd.f32 %v1967, %v1980
    %1982 = vdwg.mxu0
    %1983 = vmatpush.bf16.msra.mxu0 %v1536
    %1984 = vmatpush.bf16.msra.mxu0 %v1530
    %1985 = vmatpush.bf16.msra.mxu0 %v1524
    %1986 = vmatpush.bf16.msra.mxu0 %v1518
    %1987 = vmatpush.bf16.msra.mxu0 %v1512
    %1988 = vmatpush.bf16.msra.mxu0 %v1506
    %1989 = vmatpush.bf16.msra.mxu0 %v1500
    %1990 = vmatpush.bf16.msra.mxu0 %v1494
    %1991 = vmatmul.bf16.gmra.mxu0 %v100
    %v1992 = vpop.f32.mrf.mxu0
    %v1993 = vadd.f32 %v1979, %v1992
    %v1994 = vpop.f32.mrf.mxu0
    %v1995 = vadd.f32 %v1981, %v1994
    %1996 = vdwg.mxu0
    %1997 = vmatpush.bf16.msra.mxu0 %v1297
    %1998 = vmatpush.bf16.msra.mxu0 %v1291
    %1999 = vmatpush.bf16.msra.mxu0 %v1285
    %2000 = vmatpush.bf16.msra.mxu0 %v1279
    %2001 = vmatpush.bf16.msra.mxu0 %v1273
    %2002 = vmatpush.bf16.msra.mxu0 %v1267
    %2003 = vmatpush.bf16.msra.mxu0 %v1261
    %2004 = vmatpush.bf16.msra.mxu0 %v1255
    %2005 = vmatmul.bf16.gmra.mxu0 %v95
    %v2006 = vpop.f32.mrf.mxu0
    %v2007 = vadd.f32 0.0, %v2006
    %v2008 = vpop.f32.mrf.mxu0
    %v2009 = vadd.f32 0.0, %v2008
    %2010 = vdwg.mxu0
    %2011 = vmatpush.bf16.msra.mxu0 %v1345
    %2012 = vmatpush.bf16.msra.mxu0 %v1339
    %2013 = vmatpush.bf16.msra.mxu0 %v1333
    %2014 = vmatpush.bf16.msra.mxu0 %v1327
    %2015 = vmatpush.bf16.msra.mxu0 %v1321
    %2016 = vmatpush.bf16.msra.mxu0 %v1315
    %2017 = vmatpush.bf16.msra.mxu0 %v1309
    %2018 = vmatpush.bf16.msra.mxu0 %v1303
    %2019 = vmatmul.bf16.gmra.mxu0 %v96
    %v2020 = vpop.f32.mrf.mxu0
    %v2021 = vadd.f32 %v2007, %v2020
    %v2022 = vpop.f32.mrf.mxu0
    %v2023 = vadd.f32 %v2009, %v2022
    %2024 = vdwg.mxu0
    %2025 = vmatpush.bf16.msra.mxu0 %v1393
    %2026 = vmatpush.bf16.msra.mxu0 %v1387
    %2027 = vmatpush.bf16.msra.mxu0 %v1381
    %2028 = vmatpush.bf16.msra.mxu0 %v1375
    %2029 = vmatpush.bf16.msra.mxu0 %v1369
    %2030 = vmatpush.bf16.msra.mxu0 %v1363
    %2031 = vmatpush.bf16.msra.mxu0 %v1357
    %2032 = vmatpush.bf16.msra.mxu0 %v1351
    %2033 = vmatmul.bf16.gmra.mxu0 %v97
    %v2034 = vpop.f32.mrf.mxu0
    %v2035 = vadd.f32 %v2021, %v2034
    %v2036 = vpop.f32.mrf.mxu0
    %v2037 = vadd.f32 %v2023, %v2036
    %2038 = vdwg.mxu0
    %2039 = vmatpush.bf16.msra.mxu0 %v1441
    %2040 = vmatpush.bf16.msra.mxu0 %v1435
    %2041 = vmatpush.bf16.msra.mxu0 %v1429
    %2042 = vmatpush.bf16.msra.mxu0 %v1423
    %2043 = vmatpush.bf16.msra.mxu0 %v1417
    %2044 = vmatpush.bf16.msra.mxu0 %v1411
    %2045 = vmatpush.bf16.msra.mxu0 %v1405
    %2046 = vmatpush.bf16.msra.mxu0 %v1399
    %2047 = vmatmul.bf16.gmra.mxu0 %v98
    %v2048 = vpop.f32.mrf.mxu0
    %v2049 = vadd.f32 %v2035, %v2048
    %v2050 = vpop.f32.mrf.mxu0
    %v2051 = vadd.f32 %v2037, %v2050
    %2052 = vdwg.mxu0
    %2053 = vmatpush.bf16.msra.mxu0 %v1489
    %2054 = vmatpush.bf16.msra.mxu0 %v1483
    %2055 = vmatpush.bf16.msra.mxu0 %v1477
    %2056 = vmatpush.bf16.msra.mxu0 %v1471
    %2057 = vmatpush.bf16.msra.mxu0 %v1465
    %2058 = vmatpush.bf16.msra.mxu0 %v1459
    %2059 = vmatpush.bf16.msra.mxu0 %v1453
    %2060 = vmatpush.bf16.msra.mxu0 %v1447
    %2061 = vmatmul.bf16.gmra.mxu0 %v99
    %v2062 = vpop.f32.mrf.mxu0
    %v2063 = vadd.f32 %v2049, %v2062
    %v2064 = vpop.f32.mrf.mxu0
    %v2065 = vadd.f32 %v2051, %v2064
    %2066 = vdwg.mxu0
    %2067 = vmatpush.bf16.msra.mxu0 %v1537
    %2068 = vmatpush.bf16.msra.mxu0 %v1531
    %2069 = vmatpush.bf16.msra.mxu0 %v1525
    %2070 = vmatpush.bf16.msra.mxu0 %v1519
    %2071 = vmatpush.bf16.msra.mxu0 %v1513
    %2072 = vmatpush.bf16.msra.mxu0 %v1507
    %2073 = vmatpush.bf16.msra.mxu0 %v1501
    %2074 = vmatpush.bf16.msra.mxu0 %v1495
    %2075 = vmatmul.bf16.gmra.mxu0 %v100
    %v2076 = vpop.f32.mrf.mxu0
    %v2077 = vadd.f32 %v2063, %v2076
    %v2078 = vpop.f32.mrf.mxu0
    %v2079 = vadd.f32 %v2065, %v2078
    %2080 = vdwg.mxu0
    %2081 = vmatpush.bf16.msra.mxu0 %v1298
    %2082 = vmatpush.bf16.msra.mxu0 %v1292
    %2083 = vmatpush.bf16.msra.mxu0 %v1286
    %2084 = vmatpush.bf16.msra.mxu0 %v1280
    %2085 = vmatpush.bf16.msra.mxu0 %v1274
    %2086 = vmatpush.bf16.msra.mxu0 %v1268
    %2087 = vmatpush.bf16.msra.mxu0 %v1262
    %2088 = vmatpush.bf16.msra.mxu0 %v1256
    %2089 = vmatmul.bf16.gmra.mxu0 %v95
    %v2090 = vpop.f32.mrf.mxu0
    %v2091 = vadd.f32 0.0, %v2090
    %v2092 = vpop.f32.mrf.mxu0
    %v2093 = vadd.f32 0.0, %v2092
    %2094 = vdwg.mxu0
    %2095 = vmatpush.bf16.msra.mxu0 %v1346
    %2096 = vmatpush.bf16.msra.mxu0 %v1340
    %2097 = vmatpush.bf16.msra.mxu0 %v1334
    %2098 = vmatpush.bf16.msra.mxu0 %v1328
    %2099 = vmatpush.bf16.msra.mxu0 %v1322
    %2100 = vmatpush.bf16.msra.mxu0 %v1316
    %2101 = vmatpush.bf16.msra.mxu0 %v1310
    %2102 = vmatpush.bf16.msra.mxu0 %v1304
    %2103 = vmatmul.bf16.gmra.mxu0 %v96
    %v2104 = vpop.f32.mrf.mxu0
    %v2105 = vadd.f32 %v2091, %v2104
    %v2106 = vpop.f32.mrf.mxu0
    %v2107 = vadd.f32 %v2093, %v2106
    %2108 = vdwg.mxu0
    %2109 = vmatpush.bf16.msra.mxu0 %v1394
    %2110 = vmatpush.bf16.msra.mxu0 %v1388
    %2111 = vmatpush.bf16.msra.mxu0 %v1382
    %2112 = vmatpush.bf16.msra.mxu0 %v1376
    %2113 = vmatpush.bf16.msra.mxu0 %v1370
    %2114 = vmatpush.bf16.msra.mxu0 %v1364
    %2115 = vmatpush.bf16.msra.mxu0 %v1358
    %2116 = vmatpush.bf16.msra.mxu0 %v1352
    %2117 = vmatmul.bf16.gmra.mxu0 %v97
    %v2118 = vpop.f32.mrf.mxu0
    %v2119 = vadd.f32 %v2105, %v2118
    %v2120 = vpop.f32.mrf.mxu0
    %v2121 = vadd.f32 %v2107, %v2120
    %2122 = vdwg.mxu0
    %2123 = vmatpush.bf16.msra.mxu0 %v1442
    %2124 = vmatpush.bf16.msra.mxu0 %v1436
    %2125 = vmatpush.bf16.msra.mxu0 %v1430
    %2126 = vmatpush.bf16.msra.mxu0 %v1424
    %2127 = vmatpush.bf16.msra.mxu0 %v1418
    %2128 = vmatpush.bf16.msra.mxu0 %v1412
    %2129 = vmatpush.bf16.msra.mxu0 %v1406
    %2130 = vmatpush.bf16.msra.mxu0 %v1400
    %2131 = vmatmul.bf16.gmra.mxu0 %v98
    %v2132 = vpop.f32.mrf.mxu0
    %v2133 = vadd.f32 %v2119, %v2132
    %v2134 = vpop.f32.mrf.mxu0
    %v2135 = vadd.f32 %v2121, %v2134
    %2136 = vdwg.mxu0
    %2137 = vmatpush.bf16.msra.mxu0 %v1490
    %2138 = vmatpush.bf16.msra.mxu0 %v1484
    %2139 = vmatpush.bf16.msra.mxu0 %v1478
    %2140 = vmatpush.bf16.msra.mxu0 %v1472
    %2141 = vmatpush.bf16.msra.mxu0 %v1466
    %2142 = vmatpush.bf16.msra.mxu0 %v1460
    %2143 = vmatpush.bf16.msra.mxu0 %v1454
    %2144 = vmatpush.bf16.msra.mxu0 %v1448
    %2145 = vmatmul.bf16.gmra.mxu0 %v99
    %v2146 = vpop.f32.mrf.mxu0
    %v2147 = vadd.f32 %v2133, %v2146
    %v2148 = vpop.f32.mrf.mxu0
    %v2149 = vadd.f32 %v2135, %v2148
    %2150 = vdwg.mxu0
    %2151 = vmatpush.bf16.msra.mxu0 %v1538
    %2152 = vmatpush.bf16.msra.mxu0 %v1532
    %2153 = vmatpush.bf16.msra.mxu0 %v1526
    %2154 = vmatpush.bf16.msra.mxu0 %v1520
    %2155 = vmatpush.bf16.msra.mxu0 %v1514
    %2156 = vmatpush.bf16.msra.mxu0 %v1508
    %2157 = vmatpush.bf16.msra.mxu0 %v1502
    %2158 = vmatpush.bf16.msra.mxu0 %v1496
    %2159 = vmatmul.bf16.gmra.mxu0 %v100
    %v2160 = vpop.f32.mrf.mxu0
    %v2161 = vadd.f32 %v2147, %v2160
    %v2162 = vpop.f32.mrf.mxu0
    %v2163 = vadd.f32 %v2149, %v2162
    %2164 = vdwg.mxu0
    %2165 = vmatpush.bf16.msra.mxu0 %v1299
    %2166 = vmatpush.bf16.msra.mxu0 %v1293
    %2167 = vmatpush.bf16.msra.mxu0 %v1287
    %2168 = vmatpush.bf16.msra.mxu0 %v1281
    %2169 = vmatpush.bf16.msra.mxu0 %v1275
    %2170 = vmatpush.bf16.msra.mxu0 %v1269
    %2171 = vmatpush.bf16.msra.mxu0 %v1263
    %2172 = vmatpush.bf16.msra.mxu0 %v1257
    %2173 = vmatmul.bf16.gmra.mxu0 %v95
    %v2174 = vpop.f32.mrf.mxu0
    %v2175 = vadd.f32 0.0, %v2174
    %v2176 = vpop.f32.mrf.mxu0
    %v2177 = vadd.f32 0.0, %v2176
    %2178 = vdwg.mxu0
    %2179 = vmatpush.bf16.msra.mxu0 %v1347
    %2180 = vmatpush.bf16.msra.mxu0 %v1341
    %2181 = vmatpush.bf16.msra.mxu0 %v1335
    %2182 = vmatpush.bf16.msra.mxu0 %v1329
    %2183 = vmatpush.bf16.msra.mxu0 %v1323
    %2184 = vmatpush.bf16.msra.mxu0 %v1317
    %2185 = vmatpush.bf16.msra.mxu0 %v1311
    %2186 = vmatpush.bf16.msra.mxu0 %v1305
    %2187 = vmatmul.bf16.gmra.mxu0 %v96
    %v2188 = vpop.f32.mrf.mxu0
    %v2189 = vadd.f32 %v2175, %v2188
    %v2190 = vpop.f32.mrf.mxu0
    %v2191 = vadd.f32 %v2177, %v2190
    %2192 = vdwg.mxu0
    %2193 = vmatpush.bf16.msra.mxu0 %v1395
    %2194 = vmatpush.bf16.msra.mxu0 %v1389
    %2195 = vmatpush.bf16.msra.mxu0 %v1383
    %2196 = vmatpush.bf16.msra.mxu0 %v1377
    %2197 = vmatpush.bf16.msra.mxu0 %v1371
    %2198 = vmatpush.bf16.msra.mxu0 %v1365
    %2199 = vmatpush.bf16.msra.mxu0 %v1359
    %2200 = vmatpush.bf16.msra.mxu0 %v1353
    %2201 = vmatmul.bf16.gmra.mxu0 %v97
    %v2202 = vpop.f32.mrf.mxu0
    %v2203 = vadd.f32 %v2189, %v2202
    %v2204 = vpop.f32.mrf.mxu0
    %v2205 = vadd.f32 %v2191, %v2204
    %2206 = vdwg.mxu0
    %2207 = vmatpush.bf16.msra.mxu0 %v1443
    %2208 = vmatpush.bf16.msra.mxu0 %v1437
    %2209 = vmatpush.bf16.msra.mxu0 %v1431
    %2210 = vmatpush.bf16.msra.mxu0 %v1425
    %2211 = vmatpush.bf16.msra.mxu0 %v1419
    %2212 = vmatpush.bf16.msra.mxu0 %v1413
    %2213 = vmatpush.bf16.msra.mxu0 %v1407
    %2214 = vmatpush.bf16.msra.mxu0 %v1401
    %2215 = vmatmul.bf16.gmra.mxu0 %v98
    %v2216 = vpop.f32.mrf.mxu0
    %v2217 = vadd.f32 %v2203, %v2216
    %v2218 = vpop.f32.mrf.mxu0
    %v2219 = vadd.f32 %v2205, %v2218
    %2220 = vdwg.mxu0
    %2221 = vmatpush.bf16.msra.mxu0 %v1491
    %2222 = vmatpush.bf16.msra.mxu0 %v1485
    %2223 = vmatpush.bf16.msra.mxu0 %v1479
    %2224 = vmatpush.bf16.msra.mxu0 %v1473
    %2225 = vmatpush.bf16.msra.mxu0 %v1467
    %2226 = vmatpush.bf16.msra.mxu0 %v1461
    %2227 = vmatpush.bf16.msra.mxu0 %v1455
    %2228 = vmatpush.bf16.msra.mxu0 %v1449
    %2229 = vmatmul.bf16.gmra.mxu0 %v99
    %v2230 = vpop.f32.mrf.mxu0
    %v2231 = vadd.f32 %v2217, %v2230
    %v2232 = vpop.f32.mrf.mxu0
    %v2233 = vadd.f32 %v2219, %v2232
    %2234 = vdwg.mxu0
    %2235 = vmatpush.bf16.msra.mxu0 %v1539
    %2236 = vmatpush.bf16.msra.mxu0 %v1533
    %2237 = vmatpush.bf16.msra.mxu0 %v1527
    %2238 = vmatpush.bf16.msra.mxu0 %v1521
    %2239 = vmatpush.bf16.msra.mxu0 %v1515
    %2240 = vmatpush.bf16.msra.mxu0 %v1509
    %2241 = vmatpush.bf16.msra.mxu0 %v1503
    %2242 = vmatpush.bf16.msra.mxu0 %v1497
    %2243 = vmatmul.bf16.gmra.mxu0 %v100
    %v2244 = vpop.f32.mrf.mxu0
    %v2245 = vadd.f32 %v2231, %v2244
    %v2246 = vpop.f32.mrf.mxu0
    %v2247 = vadd.f32 %v2233, %v2246
    %2248 = vdwg.mxu0
    %2249 = vmatpush.bf16.msra.mxu0 %v1300
    %2250 = vmatpush.bf16.msra.mxu0 %v1294
    %2251 = vmatpush.bf16.msra.mxu0 %v1288
    %2252 = vmatpush.bf16.msra.mxu0 %v1282
    %2253 = vmatpush.bf16.msra.mxu0 %v1276
    %2254 = vmatpush.bf16.msra.mxu0 %v1270
    %2255 = vmatpush.bf16.msra.mxu0 %v1264
    %2256 = vmatpush.bf16.msra.mxu0 %v1258
    %2257 = vmatmul.bf16.gmra.mxu0 %v95
    %v2258 = vpop.f32.mrf.mxu0
    %v2259 = vadd.f32 0.0, %v2258
    %v2260 = vpop.f32.mrf.mxu0
    %v2261 = vadd.f32 0.0, %v2260
    %2262 = vdwg.mxu0
    %2263 = vmatpush.bf16.msra.mxu0 %v1348
    %2264 = vmatpush.bf16.msra.mxu0 %v1342
    %2265 = vmatpush.bf16.msra.mxu0 %v1336
    %2266 = vmatpush.bf16.msra.mxu0 %v1330
    %2267 = vmatpush.bf16.msra.mxu0 %v1324
    %2268 = vmatpush.bf16.msra.mxu0 %v1318
    %2269 = vmatpush.bf16.msra.mxu0 %v1312
    %2270 = vmatpush.bf16.msra.mxu0 %v1306
    %2271 = vmatmul.bf16.gmra.mxu0 %v96
    %v2272 = vpop.f32.mrf.mxu0
    %v2273 = vadd.f32 %v2259, %v2272
    %v2274 = vpop.f32.mrf.mxu0
    %v2275 = vadd.f32 %v2261, %v2274
    %2276 = vdwg.mxu0
    %2277 = vmatpush.bf16.msra.mxu0 %v1396
    %2278 = vmatpush.bf16.msra.mxu0 %v1390
    %2279 = vmatpush.bf16.msra.mxu0 %v1384
    %2280 = vmatpush.bf16.msra.mxu0 %v1378
    %2281 = vmatpush.bf16.msra.mxu0 %v1372
    %2282 = vmatpush.bf16.msra.mxu0 %v1366
    %2283 = vmatpush.bf16.msra.mxu0 %v1360
    %2284 = vmatpush.bf16.msra.mxu0 %v1354
    %2285 = vmatmul.bf16.gmra.mxu0 %v97
    %v2286 = vpop.f32.mrf.mxu0
    %v2287 = vadd.f32 %v2273, %v2286
    %v2288 = vpop.f32.mrf.mxu0
    %v2289 = vadd.f32 %v2275, %v2288
    %2290 = vdwg.mxu0
    %2291 = vmatpush.bf16.msra.mxu0 %v1444
    %2292 = vmatpush.bf16.msra.mxu0 %v1438
    %2293 = vmatpush.bf16.msra.mxu0 %v1432
    %2294 = vmatpush.bf16.msra.mxu0 %v1426
    %2295 = vmatpush.bf16.msra.mxu0 %v1420
    %2296 = vmatpush.bf16.msra.mxu0 %v1414
    %2297 = vmatpush.bf16.msra.mxu0 %v1408
    %2298 = vmatpush.bf16.msra.mxu0 %v1402
    %2299 = vmatmul.bf16.gmra.mxu0 %v98
    %v2300 = vpop.f32.mrf.mxu0
    %v2301 = vadd.f32 %v2287, %v2300
    %v2302 = vpop.f32.mrf.mxu0
    %v2303 = vadd.f32 %v2289, %v2302
    %2304 = vdwg.mxu0
    %2305 = vmatpush.bf16.msra.mxu0 %v1492
    %2306 = vmatpush.bf16.msra.mxu0 %v1486
    %2307 = vmatpush.bf16.msra.mxu0 %v1480
    %2308 = vmatpush.bf16.msra.mxu0 %v1474
    %2309 = vmatpush.bf16.msra.mxu0 %v1468
    %2310 = vmatpush.bf16.msra.mxu0 %v1462
    %2311 = vmatpush.bf16.msra.mxu0 %v1456
    %2312 = vmatpush.bf16.msra.mxu0 %v1450
    %2313 = vmatmul.bf16.gmra.mxu0 %v99
    %v2314 = vpop.f32.mrf.mxu0
    %v2315 = vadd.f32 %v2301, %v2314
    %v2316 = vpop.f32.mrf.mxu0
    %v2317 = vadd.f32 %v2303, %v2316
    %2318 = vdwg.mxu0
    %2319 = vmatpush.bf16.msra.mxu0 %v1540
    %2320 = vmatpush.bf16.msra.mxu0 %v1534
    %2321 = vmatpush.bf16.msra.mxu0 %v1528
    %2322 = vmatpush.bf16.msra.mxu0 %v1522
    %2323 = vmatpush.bf16.msra.mxu0 %v1516
    %2324 = vmatpush.bf16.msra.mxu0 %v1510
    %2325 = vmatpush.bf16.msra.mxu0 %v1504
    %2326 = vmatpush.bf16.msra.mxu0 %v1498
    %2327 = vmatmul.bf16.gmra.mxu0 %v100
    %v2328 = vpop.f32.mrf.mxu0
    %v2329 = vadd.f32 %v2315, %v2328
    %v2330 = vpop.f32.mrf.mxu0
    %v2331 = vadd.f32 %v2317, %v2330
    %2332 = vdwg.mxu0
    %v2333 = vtanh.pop %v1909
    %v2334 = vtanh.pop %v1993
    %v2335 = vtanh.pop %v2077
    %v2336 = vtanh.pop %v2161
    %v2337 = vtanh.pop %v2245
    %v2338 = vtanh.pop %v2329
    %v2339 = vtanh.pop %v1911
    %v2340 = vtanh.pop %v1995
    %v2341 = vtanh.pop %v2079
    %v2342 = vtanh.pop %v2163
    %v2343 = vtanh.pop %v2247
    %v2344 = vtanh.pop %v2331
    %v2345 = vld [vmem:[#allocation7] sm:$0x3f]
    %v2347 = vperm.slane %v2345, 0
    %v2348 = vperm.slane %v2345, 1
    %v2349 = vperm.slane %v2345, 2
    %v2350 = vperm.slane %v2345, 3
    %v2351 = vperm.slane %v2345, 4
    %v2352 = vperm.slane %v2345, 5
    %v2359 = vmul.f32 %v2333, %v2347
    %v2360 = vmul.f32 %v2334, %v2348
    %v2361 = vmul.f32 %v2335, %v2349
    %v2362 = vmul.f32 %v2336, %v2350
    %v2363 = vmul.f32 %v2337, %v2351
    %v2364 = vmul.f32 %v2338, %v2352
    %v2365 = vmul.f32 %v2339, %v2347
    %v2366 = vmul.f32 %v2340, %v2348
    %v2367 = vmul.f32 %v2341, %v2349
    %v2368 = vmul.f32 %v2342, %v2350
    %v2369 = vmul.f32 %v2343, %v2351
    %v2370 = vmul.f32 %v2344, %v2352
    %v2371 = vadd.f32 %v2359, %v2360
    %v2372 = vadd.f32 %v2371, %v2361
    %v2373 = vadd.f32 %v2372, %v2362
    %v2374 = vadd.f32 %v2373, %v2363
    %v2375 = vadd.f32 %v2374, %v2364
    %2376 = vadd.xlane.f32.xlu0 %v2375
    %v2377 = vpop.xlane.xlu0 %2376
    %v2378 = vadd.f32 %v2365, %v2366
    %v2379 = vadd.f32 %v2378, %v2367
    %v2380 = vadd.f32 %v2379, %v2368
    %v2381 = vadd.f32 %v2380, %v2369
    %v2382 = vadd.f32 %v2381, %v2370
    %2383 = vadd.xlane.f32.xlu0 %v2382
    %v2384 = vpop.xlane.xlu0 %2383
    %v2387 = vlaneseq
    %v2388 = vand.u32 %v2387, 127
    %v2389 = vperm.slane %v2377, %v2388
    %v2390 = vperm.slane %v2384, %v2388
    %vm2391 = vcmask 1041409
    %v2392 = vsel %vm2391, %v2390, %v2389
    %vm2394 = vcmask 58368
    %v2395 = vsel %vm2394, %v2392, -inf
    %2396 = vmax.xlane.f32.xlu0 %v2395
    %v2397 = vpop.xlane.xlu0 %2396
    %v2399 = vperm.slane %v2397, 0
    %v2400 = vperm.slane %v2397, 1
    %v2403 = vsub.f32 %v2377, %v2399
    %v2404 = vsub.f32 %v2384, %v2400
    %v2405 = vmul.f32 %v2403, 1.442695
    %v2406 = vpow.pop %v2405
    %v2407 = vmul.f32 %v2404, 1.442695
    %v2408 = vpow.pop %v2407
    %2411 = vset.pattern.permute.xlu0 0
    %2412 = vperm.xlu0 %2411, %v2406
    %v2413 = vpop.permute.xlu0 %2412
    %2414 = vset.pattern.permute.xlu0 0
    %2415 = vperm.xlu0 %2414, %v2408
    %v2416 = vpop.permute.xlu0 %2415
    %v2417 = vperm.slane %v2413, %v2388
    %v2418 = vperm.slane %v2416, %v2388
    %v2419 = vsel %vm2391, %v2418, %v2417
    %v2421 = vsel %vm2394, %v2419, 0.0
    %2422 = vadd.xlane.f32.xlu0 %v2421
    %v2423 = vpop.xlane.xlu0 %2422
    %v2424 = vrcp.pop %v2423
    %v2426 = vperm.slane %v2424, 0
    %v2427 = vperm.slane %v2424, 1
    %v2430 = vmul.f32 %v2406, %v2426
    %v2431 = vmul.f32 %v2408, %v2427
    %2433 = vset.pattern.permute.xlu0 0
    %2434 = vperm.xlu0 %2433, %v2430
    %v2435 = vpop.permute.xlu0 %2434
    %2438 = vset.pattern.permute.xlu0 0
    %2439 = vperm.xlu0 %2438, %v2431
    %v2440 = vpop.permute.xlu0 %2439
    %v2442 = vmul.f32 %v2435, %v83
    %v2443 = vmul.f32 %v2435, %v84
    %v2444 = vmul.f32 %v2435, %v85
    %v2445 = vmul.f32 %v2435, %v86
    %v2446 = vmul.f32 %v2435, %v87
    %v2447 = vmul.f32 %v2435, %v88
    %v2448 = vmul.f32 %v2440, %v89
    %v2449 = vmul.f32 %v2440, %v90
    %v2450 = vmul.f32 %v2440, %v91
    %v2451 = vmul.f32 %v2440, %v92
    %v2452 = vmul.f32 %v2440, %v93
    %v2453 = vmul.f32 %v2440, %v94
    %v2454 = vrot.slane %v2442, 4
    %v2455 = vadd.f32 %v2442, %v2454
    %v2456 = vrot.slane %v2455, 2
    %v2457 = vadd.f32 %v2455, %v2456
    %v2458 = vrot.slane %v2457, 1
    %v2459 = vadd.f32 %v2457, %v2458
    %v2460 = vrot.slane %v2443, 4
    %v2461 = vadd.f32 %v2443, %v2460
    %v2462 = vrot.slane %v2461, 2
    %v2463 = vadd.f32 %v2461, %v2462
    %v2464 = vrot.slane %v2463, 1
    %v2465 = vadd.f32 %v2463, %v2464
    %v2466 = vrot.slane %v2444, 4
    %v2467 = vadd.f32 %v2444, %v2466
    %v2468 = vrot.slane %v2467, 2
    %v2469 = vadd.f32 %v2467, %v2468
    %v2470 = vrot.slane %v2469, 1
    %v2471 = vadd.f32 %v2469, %v2470
    %v2472 = vrot.slane %v2445, 4
    %v2473 = vadd.f32 %v2445, %v2472
    %v2474 = vrot.slane %v2473, 2
    %v2475 = vadd.f32 %v2473, %v2474
    %v2476 = vrot.slane %v2475, 1
    %v2477 = vadd.f32 %v2475, %v2476
    %v2478 = vrot.slane %v2446, 4
    %v2479 = vadd.f32 %v2446, %v2478
    %v2480 = vrot.slane %v2479, 2
    %v2481 = vadd.f32 %v2479, %v2480
    %v2482 = vrot.slane %v2481, 1
    %v2483 = vadd.f32 %v2481, %v2482
    %v2484 = vrot.slane %v2447, 4
    %v2485 = vadd.f32 %v2447, %v2484
    %v2486 = vrot.slane %v2485, 2
    %v2487 = vadd.f32 %v2485, %v2486
    %v2488 = vrot.slane %v2487, 1
    %v2489 = vadd.f32 %v2487, %v2488
    %v2490 = vrot.slane %v2448, 4
    %v2491 = vadd.f32 %v2448, %v2490
    %v2492 = vrot.slane %v2491, 2
    %v2493 = vadd.f32 %v2491, %v2492
    %v2494 = vrot.slane %v2493, 1
    %v2495 = vadd.f32 %v2493, %v2494
    %v2496 = vrot.slane %v2449, 4
    %v2497 = vadd.f32 %v2449, %v2496
    %v2498 = vrot.slane %v2497, 2
    %v2499 = vadd.f32 %v2497, %v2498
    %v2500 = vrot.slane %v2499, 1
    %v2501 = vadd.f32 %v2499, %v2500
    %v2502 = vrot.slane %v2450, 4
    %v2503 = vadd.f32 %v2450, %v2502
    %v2504 = vrot.slane %v2503, 2
    %v2505 = vadd.f32 %v2503, %v2504
    %v2506 = vrot.slane %v2505, 1
    %v2507 = vadd.f32 %v2505, %v2506
    %v2508 = vrot.slane %v2451, 4
    %v2509 = vadd.f32 %v2451, %v2508
    %v2510 = vrot.slane %v2509, 2
    %v2511 = vadd.f32 %v2509, %v2510
    %v2512 = vrot.slane %v2511, 1
    %v2513 = vadd.f32 %v2511, %v2512
    %v2514 = vrot.slane %v2452, 4
    %v2515 = vadd.f32 %v2452, %v2514
    %v2516 = vrot.slane %v2515, 2
    %v2517 = vadd.f32 %v2515, %v2516
    %v2518 = vrot.slane %v2517, 1
    %v2519 = vadd.f32 %v2517, %v2518
    %v2520 = vrot.slane %v2453, 4
    %v2521 = vadd.f32 %v2453, %v2520
    %v2522 = vrot.slane %v2521, 2
    %v2523 = vadd.f32 %v2521, %v2522
    %v2524 = vrot.slane %v2523, 1
    %v2525 = vadd.f32 %v2523, %v2524
    %v2526 = vld [vmem:[%s3] sm:$0xff]
    %v2527 = vld [vmem:[%s3 + $0x8] sm:$0xff]
    %v2528 = vld [vmem:[%s3 + $0x10] sm:$0xff]
    %v2529 = vld [vmem:[%s3 + $0x18] sm:$0xff]
    %v2530 = vld [vmem:[%s3 + $0x20] sm:$0xff]
    %v2531 = vld [vmem:[%s3 + $0x28] sm:$0xff]
    %v2532 = vld [vmem:[%s3 + $0x30] sm:$0xff]
    %v2533 = vld [vmem:[%s3 + $0x38] sm:$0xff]
    %v2534 = vld [vmem:[%s3 + $0x40] sm:$0xff]
    %v2535 = vld [vmem:[%s3 + $0x48] sm:$0xff]
    %v2536 = vld [vmem:[%s3 + $0x50] sm:$0xff]
    %v2537 = vld [vmem:[%s3 + $0x58] sm:$0xff]
    %v2538 = vld [vmem:[%s3 + $0x60] sm:$0xff]
    %v2539 = vld [vmem:[%s3 + $0x68] sm:$0xff]
    %v2540 = vld [vmem:[%s3 + $0x70] sm:$0xff]
    %v2541 = vld [vmem:[%s3 + $0x78] sm:$0xff]
    %v2542 = vld [vmem:[%s3 + $0x80] sm:$0xff]
    %v2543 = vld [vmem:[%s3 + $0x88] sm:$0xff]
    %v2544 = vld [vmem:[%s3 + $0x90] sm:$0xff]
    %v2545 = vld [vmem:[%s3 + $0x98] sm:$0xff]
    %v2546 = vld [vmem:[%s3 + $0xa0] sm:$0xff]
    %v2547 = vld [vmem:[%s3 + $0xa8] sm:$0xff]
    %v2548 = vld [vmem:[%s3 + $0xb0] sm:$0xff]
    %v2549 = vld [vmem:[%s3 + $0xb8] sm:$0xff]
    %v2550 = vld [vmem:[%s3 + $0xc0] sm:$0xff]
    %v2551 = vld [vmem:[%s3 + $0xc8] sm:$0xff]
    %v2552 = vld [vmem:[%s3 + $0xd0] sm:$0xff]
    %v2553 = vld [vmem:[%s3 + $0xd8] sm:$0xff]
    %v2554 = vld [vmem:[%s3 + $0xe0] sm:$0xff]
    %v2555 = vld [vmem:[%s3 + $0xe8] sm:$0xff]
    %v2556 = vld [vmem:[%s3 + $0xf0] sm:$0xff]
    %v2557 = vld [vmem:[%s3 + $0xf8] sm:$0xff]
    %v2558 = vld [vmem:[%s3 + $0x100] sm:$0xff]
    %v2559 = vld [vmem:[%s3 + $0x108] sm:$0xff]
    %v2560 = vld [vmem:[%s3 + $0x110] sm:$0xff]
    %v2561 = vld [vmem:[%s3 + $0x118] sm:$0xff]
    %v2562 = vld [vmem:[%s3 + $0x120] sm:$0xff]
    %v2563 = vld [vmem:[%s3 + $0x128] sm:$0xff]
    %v2564 = vld [vmem:[%s3 + $0x130] sm:$0xff]
    %v2565 = vld [vmem:[%s3 + $0x138] sm:$0xff]
    %v2566 = vld [vmem:[%s3 + $0x140] sm:$0xff]
    %v2567 = vld [vmem:[%s3 + $0x148] sm:$0xff]
    %v2568 = vld [vmem:[%s3 + $0x150] sm:$0xff]
    %v2569 = vld [vmem:[%s3 + $0x158] sm:$0xff]
    %v2570 = vld [vmem:[%s3 + $0x160] sm:$0xff]
    %v2571 = vld [vmem:[%s3 + $0x168] sm:$0xff]
    %v2572 = vld [vmem:[%s3 + $0x170] sm:$0xff]
    %v2573 = vld [vmem:[%s3 + $0x178] sm:$0xff]
    %v2574 = vld [vmem:[%s3 + $0x180] sm:$0xff]
    %v2575 = vld [vmem:[%s3 + $0x188] sm:$0xff]
    %v2576 = vld [vmem:[%s3 + $0x190] sm:$0xff]
    %v2577 = vld [vmem:[%s3 + $0x198] sm:$0xff]
    %v2578 = vld [vmem:[%s3 + $0x1a0] sm:$0xff]
    %v2579 = vld [vmem:[%s3 + $0x1a8] sm:$0xff]
    %v2580 = vld [vmem:[%s3 + $0x1b0] sm:$0xff]
    %v2581 = vld [vmem:[%s3 + $0x1b8] sm:$0xff]
    %v2582 = vld [vmem:[%s3 + $0x1c0] sm:$0xff]
    %v2583 = vld [vmem:[%s3 + $0x1c8] sm:$0xff]
    %v2584 = vld [vmem:[%s3 + $0x1d0] sm:$0xff]
    %v2585 = vld [vmem:[%s3 + $0x1d8] sm:$0xff]
    %v2586 = vld [vmem:[%s3 + $0x1e0] sm:$0xff]
    %v2587 = vld [vmem:[%s3 + $0x1e8] sm:$0xff]
    %v2588 = vld [vmem:[%s3 + $0x1f0] sm:$0xff]
    %v2589 = vld [vmem:[%s3 + $0x1f8] sm:$0xff]
    %v2590 = vld [vmem:[%s3 + $0x200] sm:$0xff]
    %v2591 = vld [vmem:[%s3 + $0x208] sm:$0xff]
    %v2592 = vld [vmem:[%s3 + $0x210] sm:$0xff]
    %v2593 = vld [vmem:[%s3 + $0x218] sm:$0xff]
    %v2594 = vld [vmem:[%s3 + $0x220] sm:$0xff]
    %v2595 = vld [vmem:[%s3 + $0x228] sm:$0xff]
    %v2596 = vld [vmem:[%s3 + $0x230] sm:$0xff]
    %v2597 = vld [vmem:[%s3 + $0x238] sm:$0xff]
    %v2598 = vld [vmem:[%s3 + $0x240] sm:$0xff]
    %v2599 = vld [vmem:[%s3 + $0x248] sm:$0xff]
    %v2600 = vld [vmem:[%s3 + $0x250] sm:$0xff]
    %v2601 = vld [vmem:[%s3 + $0x258] sm:$0xff]
    %v2602 = vld [vmem:[%s3 + $0x260] sm:$0xff]
    %v2603 = vld [vmem:[%s3 + $0x268] sm:$0xff]
    %v2604 = vld [vmem:[%s3 + $0x270] sm:$0xff]
    %v2605 = vld [vmem:[%s3 + $0x278] sm:$0xff]
    %v2606 = vld [vmem:[%s3 + $0x280] sm:$0xff]
    %v2607 = vld [vmem:[%s3 + $0x288] sm:$0xff]
    %v2608 = vld [vmem:[%s3 + $0x290] sm:$0xff]
    %v2609 = vld [vmem:[%s3 + $0x298] sm:$0xff]
    %v2610 = vld [vmem:[%s3 + $0x2a0] sm:$0xff]
    %v2611 = vld [vmem:[%s3 + $0x2a8] sm:$0xff]
    %v2612 = vld [vmem:[%s3 + $0x2b0] sm:$0xff]
    %v2613 = vld [vmem:[%s3 + $0x2b8] sm:$0xff]
    %v2614 = vld [vmem:[%s3 + $0x2c0] sm:$0xff]
    %v2615 = vld [vmem:[%s3 + $0x2c8] sm:$0xff]
    %v2616 = vld [vmem:[%s3 + $0x2d0] sm:$0xff]
    %v2617 = vld [vmem:[%s3 + $0x2d8] sm:$0xff]
    %v2618 = vld [vmem:[%s3 + $0x2e0] sm:$0xff]
    %v2619 = vld [vmem:[%s3 + $0x2e8] sm:$0xff]
    %v2620 = vld [vmem:[%s3 + $0x2f0] sm:$0xff]
    %v2621 = vld [vmem:[%s3 + $0x2f8] sm:$0xff]
    %v2622 = vld [vmem:[#allocation8] sm:$0x1]
    %v2624 = vperm.slane %v2622, 0
    %v2638 = vsel %vm2391, %v2495, %v2459
    %v2639 = vsel %vm2391, %v2501, %v2465
    %v2640 = vsel %vm2391, %v2507, %v2471
    %v2641 = vsel %vm2391, %v2513, %v2477
    %v2642 = vsel %vm2391, %v2519, %v2483
    %v2643 = vsel %vm2391, %v2525, %v2489
    %2650 = vmatpush.msra.mxu0 %v2541
    %2651 = vmatpush.msra.mxu0 %v2540
    %2652 = vmatpush.msra.mxu0 %v2539
    %2653 = vmatpush.msra.mxu0 %v2538
    %2654 = vmatpush.msra.mxu0 %v2537
    %2655 = vmatpush.msra.mxu0 %v2536
    %2656 = vmatpush.msra.mxu0 %v2535
    %2657 = vmatpush.msra.mxu0 %v2534
    %2658 = vmatpush.msra.mxu0 %v2533
    %2659 = vmatpush.msra.mxu0 %v2532
    %2660 = vmatpush.msra.mxu0 %v2531
    %2661 = vmatpush.msra.mxu0 %v2530
    %2662 = vmatpush.msra.mxu0 %v2529
    %2663 = vmatpush.msra.mxu0 %v2528
    %2664 = vmatpush.msra.mxu0 %v2527
    %2665 = vmatpush.msra.mxu0 %v2526
    %2666 = vmatmul.f32.gmra.mxu0 %v2638
    %v2667 = vpop.f32.mrf.mxu0
    %v2668 = vadd.f32 %v2624, %v2667
    %2669 = vdwg.mxu0
    %2670 = vmatpush.msra.mxu0 %v2557
    %2671 = vmatpush.msra.mxu0 %v2556
    %2672 = vmatpush.msra.mxu0 %v2555
    %2673 = vmatpush.msra.mxu0 %v2554
    %2674 = vmatpush.msra.mxu0 %v2553
    %2675 = vmatpush.msra.mxu0 %v2552
    %2676 = vmatpush.msra.mxu0 %v2551
    %2677 = vmatpush.msra.mxu0 %v2550
    %2678 = vmatpush.msra.mxu0 %v2549
    %2679 = vmatpush.msra.mxu0 %v2548
    %2680 = vmatpush.msra.mxu0 %v2547
    %2681 = vmatpush.msra.mxu0 %v2546
    %2682 = vmatpush.msra.mxu0 %v2545
    %2683 = vmatpush.msra.mxu0 %v2544
    %2684 = vmatpush.msra.mxu0 %v2543
    %2685 = vmatpush.msra.mxu0 %v2542
    %2686 = vmatmul.f32.gmra.mxu0 %v2639
    %v2687 = vpop.f32.mrf.mxu0
    %v2688 = vadd.f32 %v2668, %v2687
    %2689 = vdwg.mxu0
    %2690 = vmatpush.msra.mxu0 %v2573
    %2691 = vmatpush.msra.mxu0 %v2572
    %2692 = vmatpush.msra.mxu0 %v2571
    %2693 = vmatpush.msra.mxu0 %v2570
    %2694 = vmatpush.msra.mxu0 %v2569
    %2695 = vmatpush.msra.mxu0 %v2568
    %2696 = vmatpush.msra.mxu0 %v2567
    %2697 = vmatpush.msra.mxu0 %v2566
    %2698 = vmatpush.msra.mxu0 %v2565
    %2699 = vmatpush.msra.mxu0 %v2564
    %2700 = vmatpush.msra.mxu0 %v2563
    %2701 = vmatpush.msra.mxu0 %v2562
    %2702 = vmatpush.msra.mxu0 %v2561
    %2703 = vmatpush.msra.mxu0 %v2560
    %2704 = vmatpush.msra.mxu0 %v2559
    %2705 = vmatpush.msra.mxu0 %v2558
    %2706 = vmatmul.f32.gmra.mxu0 %v2640
    %v2707 = vpop.f32.mrf.mxu0
    %v2708 = vadd.f32 %v2688, %v2707
    %2709 = vdwg.mxu0
    %2710 = vmatpush.msra.mxu0 %v2589
    %2711 = vmatpush.msra.mxu0 %v2588
    %2712 = vmatpush.msra.mxu0 %v2587
    %2713 = vmatpush.msra.mxu0 %v2586
    %2714 = vmatpush.msra.mxu0 %v2585
    %2715 = vmatpush.msra.mxu0 %v2584
    %2716 = vmatpush.msra.mxu0 %v2583
    %2717 = vmatpush.msra.mxu0 %v2582
    %2718 = vmatpush.msra.mxu0 %v2581
    %2719 = vmatpush.msra.mxu0 %v2580
    %2720 = vmatpush.msra.mxu0 %v2579
    %2721 = vmatpush.msra.mxu0 %v2578
    %2722 = vmatpush.msra.mxu0 %v2577
    %2723 = vmatpush.msra.mxu0 %v2576
    %2724 = vmatpush.msra.mxu0 %v2575
    %2725 = vmatpush.msra.mxu0 %v2574
    %2726 = vmatmul.f32.gmra.mxu0 %v2641
    %v2727 = vpop.f32.mrf.mxu0
    %v2728 = vadd.f32 %v2708, %v2727
    %2729 = vdwg.mxu0
    %2730 = vmatpush.msra.mxu0 %v2605
    %2731 = vmatpush.msra.mxu0 %v2604
    %2732 = vmatpush.msra.mxu0 %v2603
    %2733 = vmatpush.msra.mxu0 %v2602
    %2734 = vmatpush.msra.mxu0 %v2601
    %2735 = vmatpush.msra.mxu0 %v2600
    %2736 = vmatpush.msra.mxu0 %v2599
    %2737 = vmatpush.msra.mxu0 %v2598
    %2738 = vmatpush.msra.mxu0 %v2597
    %2739 = vmatpush.msra.mxu0 %v2596
    %2740 = vmatpush.msra.mxu0 %v2595
    %2741 = vmatpush.msra.mxu0 %v2594
    %2742 = vmatpush.msra.mxu0 %v2593
    %2743 = vmatpush.msra.mxu0 %v2592
    %2744 = vmatpush.msra.mxu0 %v2591
    %2745 = vmatpush.msra.mxu0 %v2590
    %2746 = vmatmul.f32.gmra.mxu0 %v2642
    %v2747 = vpop.f32.mrf.mxu0
    %v2748 = vadd.f32 %v2728, %v2747
    %2749 = vdwg.mxu0
    %2750 = vmatpush.msra.mxu0 %v2621
    %2751 = vmatpush.msra.mxu0 %v2620
    %2752 = vmatpush.msra.mxu0 %v2619
    %2753 = vmatpush.msra.mxu0 %v2618
    %2754 = vmatpush.msra.mxu0 %v2617
    %2755 = vmatpush.msra.mxu0 %v2616
    %2756 = vmatpush.msra.mxu0 %v2615
    %2757 = vmatpush.msra.mxu0 %v2614
    %2758 = vmatpush.msra.mxu0 %v2613
    %2759 = vmatpush.msra.mxu0 %v2612
    %2760 = vmatpush.msra.mxu0 %v2611
    %2761 = vmatpush.msra.mxu0 %v2610
    %2762 = vmatpush.msra.mxu0 %v2609
    %2763 = vmatpush.msra.mxu0 %v2608
    %2764 = vmatpush.msra.mxu0 %v2607
    %2765 = vmatpush.msra.mxu0 %v2606
    %2766 = vmatmul.f32.gmra.mxu0 %v2643
    %v2767 = vpop.f32.mrf.mxu0
    %v2768 = vadd.f32 %v2748, %v2767
    %2769 = vdwg.mxu0
    %v2771 = vrot.slane %v2768, 1
    %vm2773 = vcmask 24576
    %2774 = vst.msk [vmem:[#allocation10] sm:$0x1] %vm2773, %v2768
    %2775 = vst.msk [vmem:[#allocation10 + $0x1] sm:$0x1] %vm2773, %v2771
    %v2776 = vperm.slane %v2435, %v2388
    %v2777 = vperm.slane %v2440, %v2388
    %vm2780 = vcmask 57344
    %2781 = vst.msk [vmem:[#allocation11] sm:$0x1] %vm2780, %v2776
    %2782 = vst.msk [vmem:[#allocation11 + $0x1] sm:$0x1] %vm2780, %v2777
    // Predicated region
    $region38: #{tpu_custom_call.1} parent=1 // pred_check
      _
    $region39: #{tpu_custom_call.1} parent=1 // pred_check_branch
      %2784 = sbr.rel (0) target = $region41
    $region40: #{tpu_custom_call.1} parent=1 // pred_region
      %2786 = vsyncadd [#allocation4], 0
      %s2787 = sshll.u32 [#allocation10], 4
      %s2788 = int_to_ptr.vmem [resolvable:$true] %s2787
      %s2789 = sshll.u32 %s5, 4
      %s2790 = int_to_ptr.hbm [resolvable:$true] %s2789
      %2795 = dma.vmem_to_hbm [thread:$0]  %s2788, 32, %s2790, [#allocation4], 16, 16, 1
    $region41: #{tpu_custom_call.1} parent=1 // pred_fallthru
      _
    // Predicated region
    $region42: #{tpu_custom_call.1} parent=1 // pred_check
      _
    $region43: #{tpu_custom_call.1} parent=1 // pred_check_branch
      %2797 = sbr.rel (0) target = $region45
    $region44: #{tpu_custom_call.1} parent=1 // pred_region
      %2799 = vsyncadd [#allocation12], 0
      %s2800 = sshll.u32 [#allocation11], 4
      %s2801 = int_to_ptr.vmem [resolvable:$true] %s2800
      %s2802 = sshll.u32 %s6, 4
      %s2803 = int_to_ptr.hbm [resolvable:$true] %s2802
      %2808 = dma.vmem_to_hbm [thread:$0]  %s2801, 32, %s2803, [#allocation12], 16, 16, 1
    $region45: #{tpu_custom_call.1} parent=1 // pred_fallthru
      _
    // Predicated region
    $region46: #{tpu_custom_call.1} parent=1 // pred_check
      _
    $region47: #{tpu_custom_call.1} parent=1 // pred_check_branch
      %2810 = sbr.rel (0) target = $region49
    $region48: #{tpu_custom_call.1} parent=1 // pred_region
      %2812 = dma.done [#allocation4], 32
    $region49: #{tpu_custom_call.1} parent=1 // pred_fallthru
      _
    // Predicated region
    $region50: #{tpu_custom_call.1} parent=1 // pred_check
      _
    $region51: #{tpu_custom_call.1} parent=1 // pred_check_branch
      %2814 = sbr.rel (0) target = $region53
    $region52: #{tpu_custom_call.1} parent=1 // pred_region
      %2816 = dma.done [#allocation12], 32
    $region53: #{tpu_custom_call.1} parent=1 // pred_fallthru
      _
    %2817 = vsyncpa [#allocation3], 1
    %2818 = vsyncpa [#allocation6], 1
    %2819 = vsyncpa [#allocation9], 1
    %2820 = vsyncpa [#allocation4], 1
    %2821 = vsyncpa [#allocation12], 1

</llo_original>
